<compile_context>
chip_gen: v5e
topology: v5e:2x2
jax: 0.10.0
libtpu: 0.0.40
codegen_flags: <defaults>
</compile_context>

<pallas_src>
import math

import jax
import jax.numpy as jnp
import numpy as np
from jax.experimental import pallas as pl
from jax.experimental.pallas import tpu as pltpu


# --------------------------------------------------------------------------
# Kernel 1: per batch-block computation of P and L_var
#   enc   = tanh(x_flat @ [Wp|Wc] + [bp|bc])              (Bb*N, 2H)
#   tmp   = enc @ Wb_pad = [0 | enc_P @ Wb]               (Bb*N, 2H)
#   pw    = einsum('bih,bjh->bij', tmp, enc)              (Bb, N, N)
#   P     = (1 - I) * exp(pw)
#   L     = I * colsum(P) - (1 - I) * P
#   L_var = L with row 0 replaced by exp(r0)  (per-batch scalar broadcast)
# --------------------------------------------------------------------------
def _struct_scores_kernel(x_ref, w_ref, b_ref, wbp_ref, r0e_ref,
                          p_ref, lvar_ref):
    bb, n, d = x_ref.shape
    h2 = w_ref.shape[1]                                   # 2H

    # Flatten batch*node rows so the MXU sees Bb*N rows, not N.
    x_flat = x_ref[...].reshape(bb * n, d)                # (Bb*N, D)

    # Fused parent/child encoder: one matmul + one tanh.
    enc = jnp.tanh(
        jnp.dot(x_flat, w_ref[...], preferred_element_type=jnp.float32)
        + b_ref[...])                                     # (Bb*N, 2H) = [enc_P|enc_C]

    # Bilinear scores via the zero-padded weight (no lane splitting needed).
    tmp = jnp.dot(enc, wbp_ref[...],
                  preferred_element_type=jnp.float32)     # (Bb*N, 2H) = [0 | enc_P@Wb]
    pw = jnp.einsum("bih,bjh->bij",
                    tmp.reshape(bb, n, h2), enc.reshape(bb, n, h2),
                    preferred_element_type=jnp.float32)   # (Bb, N, N)

    row = jax.lax.broadcasted_iota(jnp.int32, (bb, n, n), 1)
    col = jax.lax.broadcasted_iota(jnp.int32, (bb, n, n), 2)
    off_diag = row != col

    # NOTE: exp is intentionally unguarded to match the torch reference.
    p_mat = jnp.where(off_diag, jnp.exp(pw), 0.0)         # (Bb, N, N)
    col_sum = jnp.sum(p_mat, axis=1, keepdims=True)       # (Bb, 1, N)  sum over parents
    lap = jnp.where(off_diag, -p_mat,
                    jnp.broadcast_to(col_sum, (bb, n, n)))
    l_var = jnp.where(row == 0,
                      jnp.broadcast_to(r0e_ref[...], (bb, n, n)),  # (Bb,1,1) scalar/row
                      lap)

    p_ref[...] = p_mat
    lvar_ref[...] = l_var


# --------------------------------------------------------------------------
# Kernel 2: A = mask_1j * (P @ Linv) - mask_i1 * (P @ Linv^T)
#   Linv and Linv^T arrive pre-concatenated as (Bb, N, 2N) -> one batched
#   matmul, no in-kernel transpose.
# --------------------------------------------------------------------------
def _tree_weights_kernel(p_ref, lcat_ref, a_ref):
    bb, n, _ = p_ref.shape
    p_mat = p_ref[...]                                    # (Bb, N, N)
    lcat = lcat_ref[...]                                  # (Bb, N, 2N) = [Linv | Linv^T]

    both = jnp.einsum("bij,bjk->bik", p_mat, lcat,
                      preferred_element_type=jnp.float32) # (Bb, N, 2N)
    pl_mat = both[:, :, :n]                               # P @ Linv
    plt_mat = both[:, :, n:]                              # P @ Linv^T

    row = jax.lax.broadcasted_iota(jnp.int32, (bb, n, n), 1)
    col = jax.lax.broadcasted_iota(jnp.int32, (bb, n, n), 2)
    a_ref[...] = (jnp.where(col != 0, pl_mat, 0.0)
                  - jnp.where(row != 0, plt_mat, 0.0))


# --------------------------------------------------------------------------
# Wrapper
# --------------------------------------------------------------------------
def _pick_batch_block(B, N, target_rows=256):
    """Largest divisor of B with Bb*N <= target_rows (MXU height: 256 on
    v6e/v7x, 128 is enough on v5e). For the toy shapes this collapses the whole
    problem into one grid step; for large B the grid keeps >= 2 steps (v7x)."""
    cap = max(1, target_rows // N)
    bb = 1
    for d in range(1, B + 1):
        if B % d == 0 and d <= cap:
            bb = d
    return bb


def struct_attention_forward(x, params):
    B, N, D = x.shape
    H = params["Wp"].shape[1]
    f32 = jnp.float32

    # ---- wrapper-side weight fusion (done once, outside the grid) ---------
    W_pc = jnp.concatenate([params["Wp"], params["Wc"]], axis=1)        # (D, 2H)
    b_pc = jnp.concatenate([params["bp"], params["bc"]], axis=1)        # (1, 2H)
    # Embed (H, H) bilinear weight: [enc_P|enc_C] @ Wb_pad = [0 | enc_P @ Wb].
    Wb_pad = jnp.zeros((2 * H, 2 * H), f32).at[:H, H:].set(params["Wb"])
    # Only node 0's r_score is used downstream -> compute exp(r0) here.
    r0 = x[:, 0, :] @ params["Wr"] + params["br"]                       # (B, 1)
    r0_exp = jnp.exp(r0).reshape(B, 1, 1)                               # (B, 1, 1)

    Bb = _pick_batch_block(B, N)                                        # batches / step
    G = B // Bb

    scores_call = pl.pallas_call(
        _struct_scores_kernel,
        out_shape=(jax.ShapeDtypeStruct((B, N, N), f32),
                   jax.ShapeDtypeStruct((B, N, N), f32)),
        grid=(G,),
        in_specs=[
            pl.BlockSpec((Bb, N, D), lambda g: (g, 0, 0)),      # x block
            pl.BlockSpec((D, 2 * H), lambda g: (0, 0)),         # [Wp | Wc]
            pl.BlockSpec((1, 2 * H), lambda g: (0, 0)),         # [bp | bc]
            pl.BlockSpec((2 * H, 2 * H), lambda g: (0, 0)),     # padded bilinear
            pl.BlockSpec((Bb, 1, 1), lambda g: (g, 0, 0)),      # exp(r0) per batch
        ],
        out_specs=(pl.BlockSpec((Bb, N, N), lambda g: (g, 0, 0)),
                   pl.BlockSpec((Bb, N, N), lambda g: (g, 0, 0))),
        compiler_params=pltpu.CompilerParams(dimension_semantics=("parallel",)),
    )
    P, L_var = scores_call(x, W_pc, b_pc, Wb_pad, r0_exp)

    # TODO(synk): torch uses pinverse (SVD) which has no Pallas equivalent; the
    # Laplacian with the exp(r0) root row is generically invertible, so use the
    # far cheaper batched LU inverse (MXU-friendly) instead of SVD pinv.
    L_inv = jnp.linalg.inv(L_var)
    L_cat = jnp.concatenate([L_inv, jnp.swapaxes(L_inv, 1, 2)], axis=2)  # (B, N, 2N)

    tree_call = pl.pallas_call(
        _tree_weights_kernel,
        out_shape=jax.ShapeDtypeStruct((B, N, N), f32),
        grid=(G,),
        in_specs=[pl.BlockSpec((Bb, N, N), lambda g: (g, 0, 0)),
                  pl.BlockSpec((Bb, N, 2 * N), lambda g: (g, 0, 0))],
        out_specs=pl.BlockSpec((Bb, N, N), lambda g: (g, 0, 0)),
        compiler_params=pltpu.CompilerParams(dimension_semantics=("parallel",)),
    )
    A = tree_call(P, L_cat)
    return A


# --------------------------------------------------------------------------
# Deterministic parameter init (xavier-uniform weights, zero biases)
# --------------------------------------------------------------------------
def init_params(key, input_dim, hidden_dim):
    k1, k2, k3, k4 = jax.random.split(key, 4)

    def xavier(k, shape, fan_in, fan_out):
        bound = math.sqrt(6.0 / (fan_in + fan_out))
        return jax.random.uniform(k, shape, jnp.float32, -bound, bound)

    # torch Linear weight (out, in) -> stored transposed as (in, out)
    Wp = xavier(k1, (input_dim, hidden_dim), input_dim, hidden_dim)
    Wc = xavier(k2, (input_dim, hidden_dim), input_dim, hidden_dim)
    # torch Bilinear weight (1, H, H): fan_in = H*H, fan_out = H (torch fan calc)
    Wb = xavier(k3, (hidden_dim, hidden_dim), hidden_dim * hidden_dim, hidden_dim)
    Wr = xavier(k4, (input_dim, 1), input_dim, 1)
    return dict(
        Wp=Wp, bp=jnp.zeros((1, hidden_dim), jnp.float32),
        Wc=Wc, bc=jnp.zeros((1, hidden_dim), jnp.float32),
        Wb=Wb,
        Wr=Wr, br=jnp.zeros((1, 1), jnp.float32),
    )


# --------------------------------------------------------------------------
# Pure-JAX reference (mirrors the torch forward exactly, incl. pinverse)
# --------------------------------------------------------------------------
def reference_forward(x, params):
    Wp, bp, Wc, bc = params["Wp"], params["bp"], params["Wc"], params["bc"]
    Wb, Wr, br = params["Wb"], params["Wr"], params["br"]
    B, N, D = x.shape

    enc_p = jnp.tanh(x @ Wp + bp)
    enc_c = jnp.tanh(x @ Wc + bc)
    pw = jnp.einsum("bip,pq,bjq->bij", enc_p, Wb, enc_c)
    r = x @ Wr + br                                                 # (B, N, 1)

    eye = jnp.eye(N, dtype=x.dtype)
    mask = 1.0 - eye
    P = mask[None] * jnp.exp(pw)
    col_sum = P.sum(axis=1)                                         # (B, N) over parents
    L = eye[None] * col_sum[:, None, :] - mask[None] * P
    L_var = L.at[:, 0, :].set(jnp.exp(r[:, 0]))                     # (B,1) broadcast
    L_inv = jnp.linalg.pinv(L_var)

    m1j = (jnp.arange(N) != 0).astype(x.dtype)[None, :]             # cols
    mi1 = (jnp.arange(N) != 0).astype(x.dtype)[:, None]             # rows
    A = (m1j[None] * jnp.einsum("bij,bjk->bik", P, L_inv)
         - mi1[None] * jnp.einsum("bij,bkj->bik", P, L_inv))
    return A


if __name__ == "__main__":
    B, N, D, H = 2, 8, 32, 32   # batch, node_num, input_dim (bert_dim), hidden_dim

    key = jax.random.PRNGKey(0)
    kx, kp = jax.random.split(key)
    x = jax.random.normal(kx, (B, N, D), dtype=jnp.float32)
    params = init_params(kp, D, H)

    fwd = jax.jit(struct_attention_forward)
    A = jax.block_until_ready(fwd(x, params))

    A_ref = jax.block_until_ready(reference_forward(x, params))
    assert A.shape == (B, N, N)
    np.testing.assert_allclose(np.asarray(A), np.asarray(A_ref), rtol=1e-2, atol=2e-3)

    print("KERNEL_OK")
</pallas_src>

<mosaic_0001>
module attributes {stable_mosaic.version = 11 : i64} {
  func.func @_struct_scores_kernel(%arg0: i32, %arg1: memref<2x8x32xf32, #tpu.memory_space<vmem>>, %arg2: memref<32x64xf32, #tpu.memory_space<vmem>>, %arg3: memref<1x64xf32, #tpu.memory_space<vmem>>, %arg4: memref<64x64xf32, #tpu.memory_space<vmem>>, %arg5: memref<2x1x1xf32, #tpu.memory_space<vmem>>, %arg6: memref<2x8x8xf32, #tpu.memory_space<vmem>>, %arg7: memref<2x8x8xf32, #tpu.memory_space<vmem>>) attributes {dimension_semantics = [#tpu.dimension_semantics<parallel>], iteration_bounds = array<i64: 1>, scalar_prefetch = 0 : i64, scratch_operands = 0 : i64, tpu.core_type = #tpu.core_type<tc>, window_params = [{transform_indices = @transform_0, window_bounds = array<i64: 2, 8, 32>}, {pipeline_mode = #tpu.pipeline_mode<synchronous>, transform_indices = @transform_1, window_bounds = array<i64: 32, 64>}, {pipeline_mode = #tpu.pipeline_mode<synchronous>, transform_indices = @transform_2, window_bounds = array<i64: 1, 64>}, {pipeline_mode = #tpu.pipeline_mode<synchronous>, transform_indices = @transform_3, window_bounds = array<i64: 64, 64>}, {transform_indices = @transform_4, window_bounds = array<i64: 2, 1, 1>}, {transform_indices = @transform_5, window_bounds = array<i64: 2, 8, 8>}, {transform_indices = @transform_6, window_bounds = array<i64: 2, 8, 8>}]} {
    %c0 = arith.constant 0 : index
    %c0_0 = arith.constant 0 : index
    %c0_1 = arith.constant 0 : index
    %0 = vector.load %arg1[%c0, %c0_0, %c0_1] : memref<2x8x32xf32, #tpu.memory_space<vmem>>, vector<2x8x32xf32>
    %1 = vector.shape_cast %0 : vector<2x8x32xf32> to vector<16x32xf32>
    %c0_2 = arith.constant 0 : index
    %c0_3 = arith.constant 0 : index
    %2 = vector.load %arg2[%c0_2, %c0_3] : memref<32x64xf32, #tpu.memory_space<vmem>>, vector<32x64xf32>
    %cst = arith.constant dense<0.000000e+00> : vector<16x64xf32>
    %3 = tpu.matmul %1, %2, %cst {dimension_numbers = #tpu.dot_dimension_numbers<[1], [0], [0], [1], [0, 0, 1, 1], [], []>} : vector<16x32xf32>, vector<32x64xf32>, vector<16x64xf32> -> vector<16x64xf32>
    %c0_4 = arith.constant 0 : index
    %c0_5 = arith.constant 0 : index
    %4 = vector.load %arg3[%c0_4, %c0_5] : memref<1x64xf32, #tpu.memory_space<vmem>>, vector<1x64xf32>
    %5 = vector.broadcast %4 : vector<1x64xf32> to vector<16x64xf32>
    %6 = arith.addf %3, %5 : vector<16x64xf32>
    %7 = math.tanh %6 : vector<16x64xf32>
    %c0_6 = arith.constant 0 : index
    %c0_7 = arith.constant 0 : index
    %8 = vector.load %arg4[%c0_6, %c0_7] : memref<64x64xf32, #tpu.memory_space<vmem>>, vector<64x64xf32>
    %cst_8 = arith.constant dense<0.000000e+00> : vector<16x64xf32>
    %9 = tpu.matmul %7, %8, %cst_8 {dimension_numbers = #tpu.dot_dimension_numbers<[1], [0], [0], [1], [0, 0, 1, 1], [], []>} : vector<16x64xf32>, vector<64x64xf32>, vector<16x64xf32> -> vector<16x64xf32>
    %10 = vector.shape_cast %9 : vector<16x64xf32> to vector<2x8x64xf32>
    %11 = vector.shape_cast %7 : vector<16x64xf32> to vector<2x8x64xf32>
    "tpu.trace_start"() <{level = 10 : i32, message = "bih,bjh->bij"}> : () -> ()
    %cst_9 = arith.constant dense<0.000000e+00> : vector<2x8x8xf32>
    %12 = tpu.matmul %10, %11, %cst_9 {dimension_numbers = #tpu.dot_dimension_numbers<[2], [2], [1], [1], [0, 0, 0, 1, 1, 1], [0], [0]>} : vector<2x8x64xf32>, vector<2x8x64xf32>, vector<2x8x8xf32> -> vector<2x8x8xf32>
    "tpu.trace_stop"() : () -> ()
    %13 = tpu.iota {dimensions = array<i32: 1>} : vector<2x8x8xi32>
    %14 = tpu.iota {dimensions = array<i32: 2>} : vector<2x8x8xi32>
    %15 = arith.cmpi ne, %13, %14 : vector<2x8x8xi32>
    %16 = math.exp %12 : vector<2x8x8xf32>
    %cst_10 = arith.constant 0.000000e+00 : f32
    %17 = vector.broadcast %cst_10 : f32 to vector<2x8x8xf32>
    %18 = arith.select %15, %16, %17 : vector<2x8x8xi1>, vector<2x8x8xf32>
    %cst_11 = arith.constant dense<0.000000e+00> : vector<2x8xf32>
    %19 = vector.multi_reduction <add>, %18, %cst_11 [1] : vector<2x8x8xf32> to vector<2x8xf32>
    %20 = vector.shape_cast %19 : vector<2x8xf32> to vector<2x1x8xf32>
    %cst_12 = arith.constant 0.000000e+00 : f32
    %21 = vector.broadcast %cst_12 : f32 to vector<2x8x8xf32>
    %22 = arith.subf %21, %18 : vector<2x8x8xf32>
    %23 = vector.shape_cast %20 : vector<2x1x8xf32> to vector<2x1x8xf32>
    %24 = vector.broadcast %23 : vector<2x1x8xf32> to vector<2x8x8xf32>
    %25 = arith.select %15, %22, %24 : vector<2x8x8xi1>, vector<2x8x8xf32>
    %c0_i32 = arith.constant 0 : i32
    %26 = vector.broadcast %c0_i32 : i32 to vector<2x8x8xi32>
    %27 = arith.cmpi eq, %13, %26 : vector<2x8x8xi32>
    %c0_13 = arith.constant 0 : index
    %c0_14 = arith.constant 0 : index
    %c0_15 = arith.constant 0 : index
    %28 = vector.load %arg5[%c0_13, %c0_14, %c0_15] : memref<2x1x1xf32, #tpu.memory_space<vmem>>, vector<2x1x1xf32>
    %29 = vector.shape_cast %28 : vector<2x1x1xf32> to vector<2x1x1xf32>
    %30 = vector.broadcast %29 : vector<2x1x1xf32> to vector<2x8x8xf32>
    %31 = arith.select %27, %30, %25 : vector<2x8x8xi1>, vector<2x8x8xf32>
    %c0_16 = arith.constant 0 : index
    %c0_17 = arith.constant 0 : index
    %c0_18 = arith.constant 0 : index
    %32 = vector.load %arg6[%c0_16, %c0_17, %c0_18] : memref<2x8x8xf32, #tpu.memory_space<vmem>>, vector<2x8x8xf32>
    tpu.vector_store %arg6[%c0_16, %c0_17, %c0_18], %18 {strides = array<i32>} : memref<2x8x8xf32, #tpu.memory_space<vmem>>, vector<2x8x8xf32>,
    %c0_19 = arith.constant 0 : index
    %c0_20 = arith.constant 0 : index
    %c0_21 = arith.constant 0 : index
    %33 = vector.load %arg7[%c0_19, %c0_20, %c0_21] : memref<2x8x8xf32, #tpu.memory_space<vmem>>, vector<2x8x8xf32>
    tpu.vector_store %arg7[%c0_19, %c0_20, %c0_21], %31 {strides = array<i32>} : memref<2x8x8xf32, #tpu.memory_space<vmem>>, vector<2x8x8xf32>,
    return
  }
  func.func @transform_0(%arg0: i32) -> (i32, i32, i32) {
    %c0_i32 = arith.constant 0 : i32
    %c0_i32_0 = arith.constant 0 : i32
    %c0_i32_1 = arith.constant 0 : i32
    return %arg0, %c0_i32, %c0_i32_0 : i32, i32, i32
  }
  func.func @transform_1(%arg0: i32) -> (i32, i32) {
    %c0_i32 = arith.constant 0 : i32
    %c0_i32_0 = arith.constant 0 : i32
    %c0_i32_1 = arith.constant 0 : i32
    return %c0_i32, %c0_i32_0 : i32, i32
  }
  func.func @transform_2(%arg0: i32) -> (i32, i32) {
    %c0_i32 = arith.constant 0 : i32
    %c0_i32_0 = arith.constant 0 : i32
    %c0_i32_1 = arith.constant 0 : i32
    return %c0_i32, %c0_i32_0 : i32, i32
  }
  func.func @transform_3(%arg0: i32) -> (i32, i32) {
    %c0_i32 = arith.constant 0 : i32
    %c0_i32_0 = arith.constant 0 : i32
    %c0_i32_1 = arith.constant 0 : i32
    return %c0_i32, %c0_i32_0 : i32, i32
  }
  func.func @transform_4(%arg0: i32) -> (i32, i32, i32) {
    %c0_i32 = arith.constant 0 : i32
    %c0_i32_0 = arith.constant 0 : i32
    %c0_i32_1 = arith.constant 0 : i32
    return %arg0, %c0_i32, %c0_i32_0 : i32, i32, i32
  }
  func.func @transform_5(%arg0: i32) -> (i32, i32, i32) {
    %c0_i32 = arith.constant 0 : i32
    %c0_i32_0 = arith.constant 0 : i32
    %c0_i32_1 = arith.constant 0 : i32
    return %arg0, %c0_i32, %c0_i32_0 : i32, i32, i32
  }
  func.func @transform_6(%arg0: i32) -> (i32, i32, i32) {
    %c0_i32 = arith.constant 0 : i32
    %c0_i32_0 = arith.constant 0 : i32
    %c0_i32_1 = arith.constant 0 : i32
    return %arg0, %c0_i32, %c0_i32_0 : i32, i32, i32
  }
}

module attributes {stable_mosaic.version = 11 : i64} {
  func.func @_tree_weights_kernel(%arg0: i32, %arg1: memref<2x8x8xf32, #tpu.memory_space<vmem>>, %arg2: memref<2x8x16xf32, #tpu.memory_space<vmem>>, %arg3: memref<2x8x8xf32, #tpu.memory_space<vmem>>) attributes {dimension_semantics = [#tpu.dimension_semantics<parallel>], iteration_bounds = array<i64: 1>, scalar_prefetch = 0 : i64, scratch_operands = 0 : i64, tpu.core_type = #tpu.core_type<tc>, window_params = [{transform_indices = @transform_0, window_bounds = array<i64: 2, 8, 8>}, {transform_indices = @transform_1, window_bounds = array<i64: 2, 8, 16>}, {transform_indices = @transform_2, window_bounds = array<i64: 2, 8, 8>}]} {
    %c0 = arith.constant 0 : index
    %c0_0 = arith.constant 0 : index
    %c0_1 = arith.constant 0 : index
    %0 = vector.load %arg1[%c0, %c0_0, %c0_1] : memref<2x8x8xf32, #tpu.memory_space<vmem>>, vector<2x8x8xf32>
    %c0_2 = arith.constant 0 : index
    %c0_3 = arith.constant 0 : index
    %c0_4 = arith.constant 0 : index
    %1 = vector.load %arg2[%c0_2, %c0_3, %c0_4] : memref<2x8x16xf32, #tpu.memory_space<vmem>>, vector<2x8x16xf32>
    "tpu.trace_start"() <{level = 10 : i32, message = "bij,bjk->bik"}> : () -> ()
    %cst = arith.constant dense<0.000000e+00> : vector<2x8x16xf32>
    %2 = tpu.matmul %0, %1, %cst {dimension_numbers = #tpu.dot_dimension_numbers<[2], [1], [1], [2], [0, 0, 0, 1, 1, 2], [0], [0]>} : vector<2x8x8xf32>, vector<2x8x16xf32>, vector<2x8x16xf32> -> vector<2x8x16xf32>
    "tpu.trace_stop"() : () -> ()
    %3 = vector.extract_strided_slice %2 {offsets = [0, 0, 0], sizes = [2, 8, 8], strides = [1, 1, 1]} : vector<2x8x16xf32> to vector<2x8x8xf32>
    %4 = vector.extract_strided_slice %2 {offsets = [0, 0, 8], sizes = [2, 8, 8], strides = [1, 1, 1]} : vector<2x8x16xf32> to vector<2x8x8xf32>
    %5 = tpu.iota {dimensions = array<i32: 1>} : vector<2x8x8xi32>
    %6 = tpu.iota {dimensions = array<i32: 2>} : vector<2x8x8xi32>
    %c0_i32 = arith.constant 0 : i32
    %7 = vector.broadcast %c0_i32 : i32 to vector<2x8x8xi32>
    %8 = arith.cmpi ne, %6, %7 : vector<2x8x8xi32>
    %cst_5 = arith.constant 0.000000e+00 : f32
    %9 = vector.broadcast %cst_5 : f32 to vector<2x8x8xf32>
    %10 = arith.select %8, %3, %9 : vector<2x8x8xi1>, vector<2x8x8xf32>
    %c0_i32_6 = arith.constant 0 : i32
    %11 = vector.broadcast %c0_i32_6 : i32 to vector<2x8x8xi32>
    %12 = arith.cmpi ne, %5, %11 : vector<2x8x8xi32>
    %cst_7 = arith.constant 0.000000e+00 : f32
    %13 = vector.broadcast %cst_7 : f32 to vector<2x8x8xf32>
    %14 = arith.select %12, %4, %13 : vector<2x8x8xi1>, vector<2x8x8xf32>
    %15 = arith.subf %10, %14 : vector<2x8x8xf32>
    %c0_8 = arith.constant 0 : index
    %c0_9 = arith.constant 0 : index
    %c0_10 = arith.constant 0 : index
    %16 = vector.load %arg3[%c0_8, %c0_9, %c0_10] : memref<2x8x8xf32, #tpu.memory_space<vmem>>, vector<2x8x8xf32>
    tpu.vector_store %arg3[%c0_8, %c0_9, %c0_10], %15 {strides = array<i32>} : memref<2x8x8xf32, #tpu.memory_space<vmem>>, vector<2x8x8xf32>,
    return
  }
  func.func @transform_0(%arg0: i32) -> (i32, i32, i32) {
    %c0_i32 = arith.constant 0 : i32
    %c0_i32_0 = arith.constant 0 : i32
    %c0_i32_1 = arith.constant 0 : i32
    return %arg0, %c0_i32, %c0_i32_0 : i32, i32, i32
  }
  func.func @transform_1(%arg0: i32) -> (i32, i32, i32) {
    %c0_i32 = arith.constant 0 : i32
    %c0_i32_0 = arith.constant 0 : i32
    %c0_i32_1 = arith.constant 0 : i32
    return %arg0, %c0_i32, %c0_i32_0 : i32, i32, i32
  }
  func.func @transform_2(%arg0: i32) -> (i32, i32, i32) {
    %c0_i32 = arith.constant 0 : i32
    %c0_i32_0 = arith.constant 0 : i32
    %c0_i32_1 = arith.constant 0 : i32
    return %arg0, %c0_i32, %c0_i32_0 : i32, i32, i32
  }
}

</mosaic_0001>

<llo_original>
// kernel: custom-call.11
$region0: #{custom-call.11}
  %s0 = inlined_call_operand.vmem [shape: f32[2,8,8], index: 0, kind: input, shape index: {}]
  %s1 = inlined_call_operand.vmem [shape: f32[2,8,8], index: 1, kind: output, shape index: {0}]
  %s2 = inlined_call_operand.hbm [shape: s32[2,8], index: 2, kind: output, shape index: {1}]
  %s3 = inlined_call_operand.vmem [shape: s32[2,8], index: 3, kind: output, shape index: {2}]
  %4 = xla_tuple %s1, %s2, %s3
  $region1: #{custom-call.11} parent=0
    #allocation0 [shape = 'u8[8192]{0}', space=vmem, size = 0x2000, scoped, tag = 'operand span for operand 0']
    #allocation1 [shape = 'u8[8192]{0}', space=vmem, size = 0x2000, scoped, tag = 'operand span for operand 1']
    #allocation2 [shape = 'u8[4096]{0}', space=vmem, size = 0x1000, scoped, tag = 'operand span for operand 2']
    #allocation3 [shape = 'u8[2048]{0}', space=vmem, size = 0x800, scoped, tag = 'packed  for operand 2']
    #allocation4 [shape = 's32[2]{0}', space=sflag, size = 0x8, scoped, tag = 'scoped memory for custom-call.11']
    #allocation5 [shape = 'u8[4096]{0}', space=vmem, size = 0x1000, scoped, tag = 'operand span for operand 3']
    #allocation6 [shape = 'u8[2048]{0}', space=vmem, size = 0x800, scoped, tag = 'packed  for operand 3']
    %5 = vsyncpa [#allocation4], 0
    %s6 = scalar_lea.sflag [#allocation4], 1
    %7 = vsyncpa %s6, 0
    loop: start=0, step=1, limit=4
    $region2: #{custom-call.11} parent=1 // loop_pre_header
      _
    $region3: #{custom-call.11} parent=1 // loop_header
      %s9 = sphi 0, %s13
      %p10 = scmp.ge.s32.totalorder %s9, 4
      %s21 = sphi 0, %s23
      %s24 = sphi 0, %s21
      %s25 = sphi 0, %s24
      %s41 = sphi 0, %s25
      %s49 = sphi 0, %s51
      %s52 = sphi 0, %s49
      %s53 = sphi 0, %s52
      %s69 = sphi 0, %s53
    $region4: #{custom-call.11} parent=1 // loop_header_branch
      %12 = sbr.rel (%p10) target = $region8
    $region5: #{custom-call.11} parent=1 // loop_body
      %s14 = ssub.s32 %s9, 1
      %s15 = ssub.s32 %s9, 2
      %s16 = sadd.s32 %s9, 1
      %s17 = sshrl.u32 %s9, 3
      %s18 = sshrl.u32 %s16, 3
      %s19 = ssub.s32 %s17, %s18
      %p20 = scmp.eq.s32.totalorder %s19, 0
      %s22 = sadd.s32 %s21, 1
      %s23 = scalar_select %p20, %s21, %s22
      %p26 = pneg %p20
      %p27 = scmp.eq.s32.totalorder %s9, 1
      %p28 = por %p26, %p27
      %p29 = scmp.ne.s32.totalorder %s21, %s24
      %p30 = scmp.eq.s32.totalorder %s9, 0
      %p31 = por %p29, %p30
      %p32 = scmp.ne.s32.totalorder %s21, %s24
      %p33 = scmp.eq.s32.totalorder %s14, 1
      %p34 = por %p32, %p33
      %p35 = scmp.ne.s32.totalorder %s24, %s25
      %p36 = scmp.eq.s32.totalorder %s14, 0
      %p37 = por %p35, %p36
      %p38 = scmp.ne.s32.totalorder %s24, %s25
      %p39 = scmp.eq.s32.totalorder %s15, 1
      %p40 = por %p38, %p39
      %p42 = scmp.ne.s32.totalorder %s25, %s41
      %p43 = scmp.eq.s32.totalorder %s15, 0
      %p44 = por %p42, %p43
      %s45 = sshrl.u32 %s9, 3
      %s46 = sshrl.u32 %s16, 3
      %s47 = ssub.s32 %s45, %s46
      %p48 = scmp.eq.s32.totalorder %s47, 0
      %s50 = sadd.s32 %s49, 1
      %s51 = scalar_select %p48, %s49, %s50
      %p54 = pneg %p48
      %p55 = scmp.eq.s32.totalorder %s9, 1
      %p56 = por %p54, %p55
      %p57 = scmp.ne.s32.totalorder %s49, %s52
      %p58 = scmp.eq.s32.totalorder %s9, 0
      %p59 = por %p57, %p58
      %p60 = scmp.ne.s32.totalorder %s49, %s52
      %p61 = scmp.eq.s32.totalorder %s14, 1
      %p62 = por %p60, %p61
      %p63 = scmp.ne.s32.totalorder %s52, %s53
      %p64 = scmp.eq.s32.totalorder %s14, 0
      %p65 = por %p63, %p64
      %p66 = scmp.ne.s32.totalorder %s52, %s53
      %p67 = scmp.eq.s32.totalorder %s15, 1
      %p68 = por %p66, %p67
      %p70 = scmp.ne.s32.totalorder %s53, %s69
      %p71 = scmp.eq.s32.totalorder %s15, 0
      %p72 = por %p70, %p71
      %p73 = scmp.le.s32.totalorder 1, %s9
      %p74 = scmp.lt.s32.totalorder %s9, 3
      %p75 = pnand %p73, %p74
      %p76 = pneg %p75
      // Predicated region
      $region9: #{custom-call.11} parent=5 // pred_check
        _
      $region10: #{custom-call.11} parent=5 // pred_check_branch
        %78 = sbr.rel (%p75) target = $region12
      $region11: #{custom-call.11} parent=5 // pred_region
        %s79 = ssub.s32 %s9, 1
      $region12: #{custom-call.11} parent=5 // pred_fallthru
        _
      %p80 = scmp.lt.s32.totalorder %s9, 2
      // Predicated region
      $region13: #{custom-call.11} parent=5 // pred_check
        %p81 = pneg %p80
      $region14: #{custom-call.11} parent=5 // pred_check_branch
        %83 = sbr.rel (%p81) target = $region16
      $region15: #{custom-call.11} parent=5 // pred_region
        %s84 = sand.u32 %s9, 1
        %s85 = sand.u32 %s9, 1
        %s86 = smul.addr %s85, 8
        %s87 = scalar_lea.vmem [#allocation0], %s86
        %s88 = smul.addr %s9, 8
        %s89 = scalar_lea.vmem %s0, %s88
        // Predicated region
        $region17: #{custom-call.11} parent=15 // pred_check
          _
        $region18: #{custom-call.11} parent=15 // pred_check_branch
          %91 = sbr.rel (0) target = $region20
        $region19: #{custom-call.11} parent=15 // pred_region
          // Predicated region
          $region21: #{custom-call.11} parent=19 // pred_check
            _
          $region22: #{custom-call.11} parent=19 // pred_check_branch
            %93 = sbr.rel (0) target = $region24
          $region23: #{custom-call.11} parent=19 // pred_region
            // Predicated region
            $region36: #{custom-call.11} parent=23 // pred_check
              _
            $region37: #{custom-call.11} parent=23 // pred_check_branch
              %109 = sbr.rel (0) target = $region39
            $region38: #{custom-call.11} parent=23 // pred_region
              loop: start=0, step=1, limit=1
              $region40: #{custom-call.11} parent=38 // loop_pre_header
                _
              $region41: #{custom-call.11} parent=38 // loop_header
                %s111 = sphi 0, %s115
                %p112 = scmp.ge.s32.totalorder %s111, 1
                %s116 = sphi %s89, %s89
                %s117 = sphi %s87, %s87
              $region42: #{custom-call.11} parent=38 // loop_header_branch
                %114 = sbr.rel (%p112) target = $region46
              $region43: #{custom-call.11} parent=38 // loop_body
                %v118 = vld [vmem:[%s116] sm:$0xff]
                %119 = vst [vmem:[%s117] sm:$0xff] %v118
              $region44: #{custom-call.11} parent=38 // loop_footer
                %s115 = sadd.s32 1, %s111
              $region45: #{custom-call.11} parent=38 // loop_footer_branch
                %110 = sbr.rel target = $region41
              $region46: #{custom-call.11} parent=38 // loop_exit
                _
            $region39: #{custom-call.11} parent=23 // pred_fallthru
              _
            // Predicated region
            $region47: #{custom-call.11} parent=23 // pred_check
              _
            $region48: #{custom-call.11} parent=23 // pred_check_branch
              %121 = sbr.rel target = $region50
            $region49: #{custom-call.11} parent=23 // pred_region
              _
            $region50: #{custom-call.11} parent=23 // pred_fallthru
              _
          $region24: #{custom-call.11} parent=19 // pred_fallthru
            _
          // Predicated region
          $region25: #{custom-call.11} parent=19 // pred_check
            _
          $region26: #{custom-call.11} parent=19 // pred_check_branch
            %95 = sbr.rel target = $region28
          $region27: #{custom-call.11} parent=19 // pred_region
            %s97 = ssub.s32 256, 1
            loop: start=0, step=1, limit=1
            $region29: #{custom-call.11} parent=27 // loop_pre_header
              _
            $region30: #{custom-call.11} parent=27 // loop_header
              %s99 = sphi 0, %s103
              %p100 = scmp.ge.s32.totalorder %s99, 1
              %s104 = sphi %s89, %s89
              %s105 = sphi %s87, %s87
            $region31: #{custom-call.11} parent=27 // loop_header_branch
              %102 = sbr.rel (%p100) target = $region35
            $region32: #{custom-call.11} parent=27 // loop_body
              %v106 = vld [vmem:[%s104] sm:%s97]
              %107 = vst [vmem:[%s105] sm:%s97] %v106
            $region33: #{custom-call.11} parent=27 // loop_footer
              %s103 = sadd.s32 1, %s99
            $region34: #{custom-call.11} parent=27 // loop_footer_branch
              %98 = sbr.rel target = $region30
            $region35: #{custom-call.11} parent=27 // loop_exit
              _
          $region28: #{custom-call.11} parent=19 // pred_fallthru
            _
        $region20: #{custom-call.11} parent=15 // pred_fallthru
          _
        %122 = vnop
      $region16: #{custom-call.11} parent=5 // pred_fallthru
        _
      %p123 = scmp.le.s32.totalorder 1, %s9
      %p124 = scmp.lt.s32.totalorder %s9, 3
      %p125 = pnand %p123, %p124
      %p126 = pneg %p125
      // Predicated region
      $region51: #{custom-call.11} parent=5 // pred_check
        _
      $region52: #{custom-call.11} parent=5 // pred_check_branch
        %128 = sbr.rel (%p125) target = $region54
      $region53: #{custom-call.11} parent=5 // pred_region
        #allocation7 [shape = 's32[8,128]{1,0}', space=vmem, size = 0x1000, scoped, tag = 'scratch for permutations']
        %s129 = ssub.s32 %s9, 1
        %s130 = sand.u32 %s14, 1
        %s131 = sand.u32 %s14, 1
        %s132 = smul.addr %s131, 8
        %s133 = scalar_lea.vmem [#allocation0], %s132
        %s134 = sand.u32 %s14, 1
        %s135 = sand.u32 %s14, 1
        %s136 = smul.addr %s135, 8
        %s137 = scalar_lea.vmem [#allocation0], %s136
        %s138 = sand.u32 %s14, 1
        %s139 = sand.u32 %s14, 1
        %s140 = smul.addr %s139, 8
        %s141 = scalar_lea.vmem [#allocation1], %s140
        %p142 = pneg %p37
        %p143 = pneg %p34
        %s144 = sand.u32 %s24, 1
        %s145 = scalar_lea.sflag [#allocation4], %s144
        %s146 = sand.u32 %s24, 1
        %s147 = smul.addr %s146, 2
        %s148 = scalar_lea.vmem [#allocation3], %s147
        %p149 = pneg %p65
        %p150 = pneg %p62
        %s151 = sand.u32 %s52, 1
        %s152 = sand.u32 %s52, 1
        %s153 = smul.addr %s152, 2
        %s154 = scalar_lea.vmem [#allocation6], %s153
        %s155 = sshrl.u32 %s14, 3
        %s156 = sshrl.u32 %s14, 3
        %v157 = vld [vmem:[%s133] sm:$0xff]
        %158 = vst [vmem:[%s141] sm:$0xff] %v157
        %s159 = sand.u32 %s14, 7
        %s160 = scalar_lea.vmem [#allocation2], %s159
        %s161 = sand.u32 %s14, 7
        %s162 = scalar_lea.vmem [#allocation5], %s161
        %163 = vst [vmem:[%s160] sm:$0x1] 0
        %v164 = vlaneseq
        %v165 = vshrl.u32 %v164, 7
        %v166 = vmov %v165
        %168 = vst [vmem:[#allocation7] sm:$0xff] %v166
        loop: start=0, step=1, limit=8
        $region56: #{custom-call.11} parent=53 // loop_pre_header
          _
        $region57: #{custom-call.11} parent=53 // loop_header
          %s170 = sphi 0, %s174
          %p171 = scmp.ge.s32.totalorder %s170, 8
        $region58: #{custom-call.11} parent=53 // loop_header_branch
          %173 = sbr.rel (%p171) target = $region62
        $region59: #{custom-call.11} parent=53 // loop_body
          %v175 = vstv %s170
          %v176 = vlaneseq
          %v177 = vshrl.u32 %v176, 7
          %v178 = vmov %v177
          %v179 = vld [vmem:[%s141] sm:$0xff]
          %v180 = vand.u32 2147483647, %v179
          %v182 = vstv %s170
          %vm183 = vcmp.ge.s32.totalorder %v178, %v182
          %vm184 = vcmp.lt.s32.totalorder %v178, 8
          %vm185 = vmand %vm183, %vm184
          %vm186 = vcmp.lt.f32.partialorder -inf, %v180
          %vm187 = vmand %vm185, %vm186
          %v188 = vsel %vm187, %v178, %v175
          %v189 = vsel %vm187, %v180, -inf
          %v190 = vrot.slane %v189, 1
          %v191 = vrot.slane %v188, 1
          %vm192 = vcmp.ge.f32.partialorder %v190, %v189
          %v193 = vsel %vm192, %v190, %v189
          %v194 = vsel %vm192, %v191, %v188
          %v195 = vrot.slane %v190, 1
          %v196 = vrot.slane %v191, 1
          %vm197 = vcmp.ge.f32.partialorder %v195, %v193
          %v198 = vsel %vm197, %v195, %v193
          %v199 = vsel %vm197, %v196, %v194
          %v200 = vrot.slane %v195, 1
          %v201 = vrot.slane %v196, 1
          %vm202 = vcmp.ge.f32.partialorder %v200, %v198
          %v203 = vsel %vm202, %v200, %v198
          %v204 = vsel %vm202, %v201, %v199
          %v205 = vrot.slane %v200, 1
          %v206 = vrot.slane %v201, 1
          %vm207 = vcmp.ge.f32.partialorder %v205, %v203
          %v208 = vsel %vm207, %v205, %v203
          %v209 = vsel %vm207, %v206, %v204
          %v210 = vrot.slane %v205, 1
          %v211 = vrot.slane %v206, 1
          %vm212 = vcmp.ge.f32.partialorder %v210, %v208
          %v213 = vsel %vm212, %v210, %v208
          %v214 = vsel %vm212, %v211, %v209
          %v215 = vrot.slane %v210, 1
          %v216 = vrot.slane %v211, 1
          %vm217 = vcmp.ge.f32.partialorder %v215, %v213
          %v218 = vsel %vm217, %v215, %v213
          %v219 = vsel %vm217, %v216, %v214
          %v220 = vrot.slane %v215, 1
          %v221 = vrot.slane %v216, 1
          %vm222 = vcmp.ge.f32.partialorder %v220, %v218
          %v223 = vsel %vm222, %v220, %v218
          %v224 = vsel %vm222, %v221, %v219
          %s225 = ssub.s32 128, %s170
          %226 = vrot.lane.b32.xlu0 %v224, %s225
          %v227 = vpop.permute.xlu0 %226
          %s228 = vtos %v227
          %v229 = vstv %s170
          %v230 = vlaneseq
          %v231 = vand.u32 %v230, 127
          %vm232 = vcmp.eq.s32.totalorder %v231, %v229
          %v233 = vstv %s228
          %v234 = vld [vmem:[%s160] ss:$0 sm:$0xff]
          %v235 = vsel %vm232, %v233, %v234
          %236 = vst [vmem:[%s160] sm:$0x1] %v235
          %s237 = scalar_lea.vmem %s141, %s170 [#allocation1]
          %s238 = scalar_lea.vmem %s141, %s228 [#allocation1]
          %v239 = vld [vmem:[%s237] ss:$0 sm:$0xff]
          %v240 = vld [vmem:[%s238] ss:$0 sm:$0xff]
          %241 = vst [vmem:[%s238] sm:$0x1] %v239
          %242 = vst [vmem:[%s237] sm:$0x1] %v240
          %s243 = scalar_lea.vmem [#allocation7], %s170
          %s244 = scalar_lea.vmem [#allocation7], %s228
          %v245 = vld [vmem:[%s243] ss:$0 sm:$0xff]
          %v246 = vld [vmem:[%s244] ss:$0 sm:$0xff]
          %247 = vst [vmem:[%s244] sm:$0x1] %v245
          %248 = vst [vmem:[%s243] sm:$0x1] %v246
          %vm249 = vcmp.ne.f32.partialorder %v240, 0.0
          %vm250 = vmand %vm232, %vm249
          %v251 = vsel %vm250, %v240, 1.0
          %v252 = vlaneseq
          %v253 = vand.u32 %v252, 127
          %v254 = vstv %s170
          %vm255 = vcmp.gt.s32.totalorder %v253, %v254
          %v256 = vsel %vm255, %v240, 0.0
          %v257 = vlaneseq
          %v258 = vshrl.u32 %v257, 7
          %v259 = vmov %v258
          %v260 = vld [vmem:[%s141] sm:$0xff]
          %v262 = vstv %s170
          %vm263 = vcmp.gt.s32.totalorder %v259, %v262
          %v264 = vsel %vm263, %v251, 1.0
          %v265 = vrcp.pop %v264
          %v266 = vmul.f32 %v264, %v265
          %v267 = vsub.f32 1.0, %v266
          %v268 = vmul.f32 %v265, %v267
          %v269 = vadd.f32 %v265, %v268
          %vm270 = vweird.f32 %v264
          %vm271 = vweird.f32 %v265
          %vm272 = vmor %vm270, %vm271
          %v273 = vsel %vm272, %v265, %v269
          %v274 = vand.u32 2147483647, %v264
          %vm275 = vcmp.eq.f32.partialorder %v274, 8.507059e+37
          %v276 = vand.u32 %v264, 2147483648
          %v277 = vor.u32 1.1754944e-38, %v276
          %v278 = vsel %vm275, %v277, %v273
          %v279 = vmul.f32 %v260, %v278
          %vm280 = vmand %vm263, %vm232
          %v281 = vsel %vm280, %v279, 0.0
          %282 = vadd.xlane.f32.xlu0 %v281
          %v283 = vpop.xlane.xlu0 %282
          %v284 = vmul.f32 %v283, %v256
          %v285 = vsub.f32 %v279, %v284
          %286 = vst [vmem:[%s141] sm:$0xff] %v285
        $region60: #{custom-call.11} parent=53 // loop_footer
          %s174 = sadd.s32 1, %s170
        $region61: #{custom-call.11} parent=53 // loop_footer_branch
          %169 = sbr.rel target = $region57
        $region62: #{custom-call.11} parent=53 // loop_exit
          _
        %v287 = vld [vmem:[#allocation7] sm:$0xff]
        %s288 = scalar_lea.vmem [#allocation7], 8
        %s289 = scalar_lea.vmem [#allocation7], 16
        %s290 = scalar_lea.vmem [#allocation7], 24
        %s291 = scalar_lea.vmem [#allocation7], 32
        %s292 = scalar_lea.vmem [#allocation7], 40
        %s293 = scalar_lea.vmem [#allocation7], 48
        %s294 = scalar_lea.vmem [#allocation7], 56
        %s295 = scalar_lea.vmem [#allocation7], 64
        %s296 = scalar_lea.vmem [#allocation7], 72
        %s297 = scalar_lea.vmem [#allocation7], 80
        %s298 = scalar_lea.vmem [#allocation7], 88
        %s299 = scalar_lea.vmem [#allocation7], 96
        %s300 = scalar_lea.vmem [#allocation7], 104
        %s301 = scalar_lea.vmem [#allocation7], 112
        %s302 = scalar_lea.vmem [#allocation7], 120
        %303 = vxpose.xlu0.b32.start [1/16] %v287, 128
        %304 = vxpose.xlu0.b32.cont [2/16] 0, 128
        %305 = vxpose.xlu0.b32.cont [3/16] 0, 128
        %306 = vxpose.xlu0.b32.cont [4/16] 0, 128
        %307 = vxpose.xlu0.b32.cont [5/16] 0, 128
        %308 = vxpose.xlu0.b32.cont [6/16] 0, 128
        %309 = vxpose.xlu0.b32.cont [7/16] 0, 128
        %310 = vxpose.xlu0.b32.cont [8/16] 0, 128
        %311 = vxpose.xlu0.b32.cont [9/16] 0, 128
        %312 = vxpose.xlu0.b32.cont [10/16] 0, 128
        %313 = vxpose.xlu0.b32.cont [11/16] 0, 128
        %314 = vxpose.xlu0.b32.cont [12/16] 0, 128
        %315 = vxpose.xlu0.b32.cont [13/16] 0, 128
        %316 = vxpose.xlu0.b32.cont [14/16] 0, 128
        %317 = vxpose.xlu0.b32.cont [15/16] 0, 128
        %318 = vxpose.xlu0.b32.end [16/16] 0, 128
        %v319 = vpop.trf.xlu0
        %v320 = vpop.trf.xlu0
        %v321 = vpop.trf.xlu0
        %v322 = vpop.trf.xlu0
        %v323 = vpop.trf.xlu0
        %v324 = vpop.trf.xlu0
        %v325 = vpop.trf.xlu0
        %v326 = vpop.trf.xlu0
        %v327 = vpop.trf.xlu0
        %v328 = vpop.trf.xlu0
        %v329 = vpop.trf.xlu0
        %v330 = vpop.trf.xlu0
        %v331 = vpop.trf.xlu0
        %v332 = vpop.trf.xlu0
        %v333 = vpop.trf.xlu0
        %v334 = vpop.trf.xlu0
        %335 = vst [vmem:[%s162] sm:$0x1] %v319
        %s337 = ssub.s32 4, 1
        %v338 = vld [vmem:[#allocation2] sm:%s337]
        %s340 = ssub.s32 4, 1
        %341 = vst [vmem:[%s148] sm:%s340] %v338
        %s343 = ssub.s32 4, 1
        %v344 = vld [vmem:[#allocation5] sm:%s343]
        %s346 = ssub.s32 4, 1
        %347 = vst [vmem:[%s154] sm:%s346] %v344
        %s348 = sand.u32 %s14, 1
        %s349 = sand.u32 %s14, 1
        %s350 = smul.addr %s349, 8
        %s351 = scalar_lea.vmem [#allocation1], %s350
        %s352 = sand.u32 %s24, 1
        %s353 = scalar_lea.sflag [#allocation4], %s352
        %s354 = sand.u32 %s24, 1
        %s355 = smul.addr %s354, 2
        %s356 = scalar_lea.vmem [#allocation3], %s355
        %s357 = sand.u32 %s52, 1
        %s358 = sand.u32 %s52, 1
        %s359 = smul.addr %s358, 2
        %s360 = scalar_lea.vmem [#allocation6], %s359
        %s361 = smul.addr %s14, 8
        %s362 = scalar_lea.vmem %s1, %s361
        // Predicated region
        $region63: #{custom-call.11} parent=53 // pred_check
          _
        $region64: #{custom-call.11} parent=53 // pred_check_branch
          %364 = sbr.rel (0) target = $region66
        $region65: #{custom-call.11} parent=53 // pred_region
          // Predicated region
          $region67: #{custom-call.11} parent=65 // pred_check
            _
          $region68: #{custom-call.11} parent=65 // pred_check_branch
            %366 = sbr.rel (0) target = $region70
          $region69: #{custom-call.11} parent=65 // pred_region
            // Predicated region
            $region82: #{custom-call.11} parent=69 // pred_check
              _
            $region83: #{custom-call.11} parent=69 // pred_check_branch
              %382 = sbr.rel (0) target = $region85
            $region84: #{custom-call.11} parent=69 // pred_region
              loop: start=0, step=1, limit=1
              $region86: #{custom-call.11} parent=84 // loop_pre_header
                _
              $region87: #{custom-call.11} parent=84 // loop_header
                %s384 = sphi 0, %s388
                %p385 = scmp.ge.s32.totalorder %s384, 1
                %s389 = sphi %s351, %s351
                %s390 = sphi %s362, %s362
              $region88: #{custom-call.11} parent=84 // loop_header_branch
                %387 = sbr.rel (%p385) target = $region92
              $region89: #{custom-call.11} parent=84 // loop_body
                %v391 = vld [vmem:[%s389] sm:$0xff]
                %392 = vst [vmem:[%s390] sm:$0xff] %v391
              $region90: #{custom-call.11} parent=84 // loop_footer
                %s388 = sadd.s32 1, %s384
              $region91: #{custom-call.11} parent=84 // loop_footer_branch
                %383 = sbr.rel target = $region87
              $region92: #{custom-call.11} parent=84 // loop_exit
                _
            $region85: #{custom-call.11} parent=69 // pred_fallthru
              _
            // Predicated region
            $region93: #{custom-call.11} parent=69 // pred_check
              _
            $region94: #{custom-call.11} parent=69 // pred_check_branch
              %394 = sbr.rel target = $region96
            $region95: #{custom-call.11} parent=69 // pred_region
              _
            $region96: #{custom-call.11} parent=69 // pred_fallthru
              _
          $region70: #{custom-call.11} parent=65 // pred_fallthru
            _
          // Predicated region
          $region71: #{custom-call.11} parent=65 // pred_check
            _
          $region72: #{custom-call.11} parent=65 // pred_check_branch
            %368 = sbr.rel target = $region74
          $region73: #{custom-call.11} parent=65 // pred_region
            %s370 = ssub.s32 256, 1
            loop: start=0, step=1, limit=1
            $region75: #{custom-call.11} parent=73 // loop_pre_header
              _
            $region76: #{custom-call.11} parent=73 // loop_header
              %s372 = sphi 0, %s376
              %p373 = scmp.ge.s32.totalorder %s372, 1
              %s377 = sphi %s351, %s351
              %s378 = sphi %s362, %s362
            $region77: #{custom-call.11} parent=73 // loop_header_branch
              %375 = sbr.rel (%p373) target = $region81
            $region78: #{custom-call.11} parent=73 // loop_body
              %v379 = vld [vmem:[%s377] sm:%s370]
              %380 = vst [vmem:[%s378] sm:%s370] %v379
            $region79: #{custom-call.11} parent=73 // loop_footer
              %s376 = sadd.s32 1, %s372
            $region80: #{custom-call.11} parent=73 // loop_footer_branch
              %371 = sbr.rel target = $region76
            $region81: #{custom-call.11} parent=73 // loop_exit
              _
          $region74: #{custom-call.11} parent=65 // pred_fallthru
            _
        $region66: #{custom-call.11} parent=53 // pred_fallthru
          _
        %395 = vnop
        // Predicated region
        $region97: #{custom-call.11} parent=53 // pred_check
          %p396 = pneg %p34
        $region98: #{custom-call.11} parent=53 // pred_check_branch
          %398 = sbr.rel (%p396) target = $region100
        $region99: #{custom-call.11} parent=53 // pred_region
          %s399 = sshrl.u32 %s14, 3
          %401 = vsyncadd %s353, 0
          %s402 = smul.addr %s399, 2
          %s403 = scalar_lea.hbm %s2, %s402
          %s405 = sshll.u32 %s356, 4
          %s406 = int_to_ptr.vmem [resolvable:$true] %s405
          %s407 = sshll.u32 %s403, 4
          %s408 = int_to_ptr.hbm [resolvable:$true] %s407
          %410 = dma.vmem_to_hbm [thread:$0]  %s406, 32, %s408, %s353
        $region100: #{custom-call.11} parent=53 // pred_fallthru
          _
        // Predicated region
        $region101: #{custom-call.11} parent=53 // pred_check
          %p411 = pneg %p62
        $region102: #{custom-call.11} parent=53 // pred_check_branch
          %413 = sbr.rel (%p411) target = $region104
        $region103: #{custom-call.11} parent=53 // pred_region
          %s414 = sshrl.u32 %s14, 3
          %s415 = smul.addr %s414, 2
          %s416 = scalar_lea.vmem %s3, %s415
          // Predicated region
          $region105: #{custom-call.11} parent=103 // pred_check
            _
          $region106: #{custom-call.11} parent=103 // pred_check_branch
            %418 = sbr.rel (0) target = $region108
          $region107: #{custom-call.11} parent=103 // pred_region
            // Predicated region
            $region109: #{custom-call.11} parent=107 // pred_check
              _
            $region110: #{custom-call.11} parent=107 // pred_check_branch
              %420 = sbr.rel target = $region112
            $region111: #{custom-call.11} parent=107 // pred_region
              // Predicated region
              $region124: #{custom-call.11} parent=111 // pred_check
                _
              $region125: #{custom-call.11} parent=111 // pred_check_branch
                %436 = sbr.rel (0) target = $region127
              $region126: #{custom-call.11} parent=111 // pred_region
                %s438 = ssub.s32 4, 1
                loop: start=0, step=1, limit=1
                $region128: #{custom-call.11} parent=126 // loop_pre_header
                  _
                $region129: #{custom-call.11} parent=126 // loop_header
                  %s440 = sphi 0, %s444
                  %p441 = scmp.ge.s32.totalorder %s440, 1
                  %s445 = sphi %s360, %s360
                  %s446 = sphi %s416, %s416
                $region130: #{custom-call.11} parent=126 // loop_header_branch
                  %443 = sbr.rel (%p441) target = $region134
                $region131: #{custom-call.11} parent=126 // loop_body
                  %v447 = vld [vmem:[%s445] sm:%s438]
                  %448 = vst [vmem:[%s446] sm:%s438] %v447
                $region132: #{custom-call.11} parent=126 // loop_footer
                  %s444 = sadd.s32 1, %s440
                $region133: #{custom-call.11} parent=126 // loop_footer_branch
                  %439 = sbr.rel target = $region129
                $region134: #{custom-call.11} parent=126 // loop_exit
                  _
              $region127: #{custom-call.11} parent=111 // pred_fallthru
                _
            $region112: #{custom-call.11} parent=107 // pred_fallthru
              _
            // Predicated region
            $region113: #{custom-call.11} parent=107 // pred_check
              _
            $region114: #{custom-call.11} parent=107 // pred_check_branch
              %422 = sbr.rel (0) target = $region116
            $region115: #{custom-call.11} parent=107 // pred_region
              %s424 = ssub.s32 4, 1
              loop: start=0, step=1, limit=1
              $region117: #{custom-call.11} parent=115 // loop_pre_header
                _
              $region118: #{custom-call.11} parent=115 // loop_header
                %s426 = sphi 0, %s430
                %p427 = scmp.ge.s32.totalorder %s426, 1
                %s431 = sphi %s360, %s360
                %s432 = sphi %s416, %s416
              $region119: #{custom-call.11} parent=115 // loop_header_branch
                %429 = sbr.rel (%p427) target = $region123
              $region120: #{custom-call.11} parent=115 // loop_body
                %v433 = vld [vmem:[%s431] sm:%s424]
                %434 = vst [vmem:[%s432] sm:%s424] %v433
              $region121: #{custom-call.11} parent=115 // loop_footer
                %s430 = sadd.s32 1, %s426
              $region122: #{custom-call.11} parent=115 // loop_footer_branch
                %425 = sbr.rel target = $region118
              $region123: #{custom-call.11} parent=115 // loop_exit
                _
            $region116: #{custom-call.11} parent=107 // pred_fallthru
              _
          $region108: #{custom-call.11} parent=103 // pred_fallthru
            _
          %449 = vnop
        $region104: #{custom-call.11} parent=53 // pred_fallthru
          _
      $region54: #{custom-call.11} parent=5 // pred_fallthru
        _
      %p450 = scmp.le.s32.totalorder 2, %s9
      // Predicated region
      $region135: #{custom-call.11} parent=5 // pred_check
        %p451 = pneg %p450
      $region136: #{custom-call.11} parent=5 // pred_check_branch
        %453 = sbr.rel (%p451) target = $region138
      $region137: #{custom-call.11} parent=5 // pred_region
        %s454 = ssub.s32 %s9, 2
        %s455 = sand.u32 %s15, 1
        %s456 = sand.u32 %s15, 1
        %s457 = smul.addr %s456, 8
        %s458 = scalar_lea.vmem [#allocation1], %s457
        // Predicated region
        $region139: #{custom-call.11} parent=137 // pred_check
          %p459 = pneg %p40
        $region140: #{custom-call.11} parent=137 // pred_check_branch
          %461 = sbr.rel (%p459) target = $region142
        $region141: #{custom-call.11} parent=137 // pred_region
          %s462 = sand.u32 %s25, 1
          %s463 = scalar_lea.sflag [#allocation4], %s462
          %s464 = sand.u32 %s25, 1
          %s465 = smul.addr %s464, 2
          %s466 = scalar_lea.vmem [#allocation3], %s465
          %468 = dma.done %s463, 32
        $region142: #{custom-call.11} parent=137 // pred_fallthru
          _
        // Predicated region
        $region143: #{custom-call.11} parent=137 // pred_check
          %p469 = pneg %p68
        $region144: #{custom-call.11} parent=137 // pred_check_branch
          %471 = sbr.rel (%p469) target = $region146
        $region145: #{custom-call.11} parent=137 // pred_region
          %s472 = sand.u32 %s53, 1
          %s473 = sand.u32 %s53, 1
          %s474 = smul.addr %s473, 2
          %s475 = scalar_lea.vmem [#allocation6], %s474
        $region146: #{custom-call.11} parent=137 // pred_fallthru
          _
      $region138: #{custom-call.11} parent=5 // pred_fallthru
        _
    $region6: #{custom-call.11} parent=1 // loop_footer
      %s13 = sadd.s32 1, %s9
    $region7: #{custom-call.11} parent=1 // loop_footer_branch
      %8 = sbr.rel target = $region3
    $region8: #{custom-call.11} parent=1 // loop_exit
      _
    %476 = vsyncpa [#allocation4], 1
    %s477 = scalar_lea.sflag [#allocation4], 1
    %478 = vsyncpa %s477, 1

// kernel: custom-call.13
$region0: #{custom-call.13}
  %s0 = inlined_call_operand.vmem [shape: f32[2,1,8,8], index: 0, kind: input, shape index: {}]
  %s1 = inlined_call_operand.vmem [shape: f32[2,1,8,8], index: 1, kind: output, shape index: {}]
  $region1: #{custom-call.13} parent=0
    #allocation0 [shape = 'u8[8192]{0}', space=vmem, size = 0x2000, scoped, tag = 'operand span for operand 0']
    #allocation1 [shape = 'u8[8192]{0}', space=vmem, size = 0x2000, scoped, tag = 'operand span for operand 1']
    loop: start=0, step=1, limit=4
    $region2: #{custom-call.13} parent=1 // loop_pre_header
      _
    $region3: #{custom-call.13} parent=1 // loop_header
      %s3 = sphi 0, %s7
      %p4 = scmp.ge.s32.totalorder %s3, 4
      %s10 = sphi 0, %s36
      %s11 = sphi 0, %s32
      %s12 = sphi 0, %s28
      %s13 = sphi 0, %s24
      %s14 = sphi 0, %s10
      %s15 = sphi 0, %s11
      %s16 = sphi 0, %s12
      %s17 = sphi 0, %s13
      %s18 = sphi 0, %s14
      %s19 = sphi 0, %s15
      %s20 = sphi 0, %s16
      %s21 = sphi 0, %s17
    $region4: #{custom-call.13} parent=1 // loop_header_branch
      %6 = sbr.rel (%p4) target = $region8
    $region5: #{custom-call.13} parent=1 // loop_body
      %s8 = ssub.s32 %s3, 1
      %s9 = ssub.s32 %s3, 2
      %s22 = sadd.s32 1, %s13
      %p23 = scmp.ge.s32.totalorder %s22, 1
      %s24 = scalar_select %p23, 0, %s22
      %s25 = sadd.s32 1, %s12
      %s26 = scalar_select %p23, %s25, %s12
      %p27 = scmp.ge.s32.totalorder %s26, 1
      %s28 = scalar_select %p27, 0, %s26
      %s29 = sadd.s32 1, %s11
      %s30 = scalar_select %p27, %s29, %s11
      %p31 = scmp.ge.s32.totalorder %s30, 1
      %s32 = scalar_select %p31, 0, %s30
      %s33 = sadd.s32 1, %s10
      %s34 = scalar_select %p31, %s33, %s10
      %p35 = scmp.ge.s32.totalorder %s34, 2
      %s36 = scalar_select %p35, 0, %s34
      %p37 = scmp.le.s32.totalorder 1, %s3
      %p38 = scmp.lt.s32.totalorder %s3, 3
      %p39 = pnand %p37, %p38
      %p40 = pneg %p39
      // Predicated region
      $region9: #{custom-call.13} parent=5 // pred_check
        _
      $region10: #{custom-call.13} parent=5 // pred_check_branch
        %42 = sbr.rel (%p39) target = $region12
      $region11: #{custom-call.13} parent=5 // pred_region
        %s43 = ssub.s32 %s3, 1
      $region12: #{custom-call.13} parent=5 // pred_fallthru
        _
      %p44 = scmp.lt.s32.totalorder %s3, 2
      // Predicated region
      $region13: #{custom-call.13} parent=5 // pred_check
        %p45 = pneg %p44
      $region14: #{custom-call.13} parent=5 // pred_check_branch
        %47 = sbr.rel (%p45) target = $region16
      $region15: #{custom-call.13} parent=5 // pred_region
        %s48 = sand.u32 %s3, 1
        %s49 = sand.u32 %s3, 1
        %s50 = smul.addr %s49, 8
        %s51 = scalar_lea.vmem [#allocation0], %s50
        %s52 = sadd.s32 %s13, %s12
        %s53 = sadd.s32 %s52, %s11
        %s54 = sadd.s32 %s53, %s10
        %s55 = smul.addr %s54, 8
        %s56 = scalar_lea.vmem %s0, %s55
        // Predicated region
        $region17: #{custom-call.13} parent=15 // pred_check
          _
        $region18: #{custom-call.13} parent=15 // pred_check_branch
          %58 = sbr.rel (0) target = $region20
        $region19: #{custom-call.13} parent=15 // pred_region
          // Predicated region
          $region21: #{custom-call.13} parent=19 // pred_check
            _
          $region22: #{custom-call.13} parent=19 // pred_check_branch
            %60 = sbr.rel (0) target = $region24
          $region23: #{custom-call.13} parent=19 // pred_region
            // Predicated region
            $region36: #{custom-call.13} parent=23 // pred_check
              _
            $region37: #{custom-call.13} parent=23 // pred_check_branch
              %76 = sbr.rel (0) target = $region39
            $region38: #{custom-call.13} parent=23 // pred_region
              loop: start=0, step=1, limit=1
              $region40: #{custom-call.13} parent=38 // loop_pre_header
                _
              $region41: #{custom-call.13} parent=38 // loop_header
                %s78 = sphi 0, %s82
                %p79 = scmp.ge.s32.totalorder %s78, 1
                %s83 = sphi %s56, %s56
                %s84 = sphi %s51, %s51
              $region42: #{custom-call.13} parent=38 // loop_header_branch
                %81 = sbr.rel (%p79) target = $region46
              $region43: #{custom-call.13} parent=38 // loop_body
                %v85 = vld [vmem:[%s83] sm:$0xff]
                %86 = vst [vmem:[%s84] sm:$0xff] %v85
              $region44: #{custom-call.13} parent=38 // loop_footer
                %s82 = sadd.s32 1, %s78
              $region45: #{custom-call.13} parent=38 // loop_footer_branch
                %77 = sbr.rel target = $region41
              $region46: #{custom-call.13} parent=38 // loop_exit
                _
            $region39: #{custom-call.13} parent=23 // pred_fallthru
              _
            // Predicated region
            $region47: #{custom-call.13} parent=23 // pred_check
              _
            $region48: #{custom-call.13} parent=23 // pred_check_branch
              %88 = sbr.rel target = $region50
            $region49: #{custom-call.13} parent=23 // pred_region
              _
            $region50: #{custom-call.13} parent=23 // pred_fallthru
              _
          $region24: #{custom-call.13} parent=19 // pred_fallthru
            _
          // Predicated region
          $region25: #{custom-call.13} parent=19 // pred_check
            _
          $region26: #{custom-call.13} parent=19 // pred_check_branch
            %62 = sbr.rel target = $region28
          $region27: #{custom-call.13} parent=19 // pred_region
            %s64 = ssub.s32 256, 1
            loop: start=0, step=1, limit=1
            $region29: #{custom-call.13} parent=27 // loop_pre_header
              _
            $region30: #{custom-call.13} parent=27 // loop_header
              %s66 = sphi 0, %s70
              %p67 = scmp.ge.s32.totalorder %s66, 1
              %s71 = sphi %s56, %s56
              %s72 = sphi %s51, %s51
            $region31: #{custom-call.13} parent=27 // loop_header_branch
              %69 = sbr.rel (%p67) target = $region35
            $region32: #{custom-call.13} parent=27 // loop_body
              %v73 = vld [vmem:[%s71] sm:%s64]
              %74 = vst [vmem:[%s72] sm:%s64] %v73
            $region33: #{custom-call.13} parent=27 // loop_footer
              %s70 = sadd.s32 1, %s66
            $region34: #{custom-call.13} parent=27 // loop_footer_branch
              %65 = sbr.rel target = $region30
            $region35: #{custom-call.13} parent=27 // loop_exit
              _
          $region28: #{custom-call.13} parent=19 // pred_fallthru
            _
        $region20: #{custom-call.13} parent=15 // pred_fallthru
          _
        %89 = vnop
      $region16: #{custom-call.13} parent=5 // pred_fallthru
        _
      %p90 = scmp.le.s32.totalorder 1, %s3
      %p91 = scmp.lt.s32.totalorder %s3, 3
      %p92 = pnand %p90, %p91
      %p93 = pneg %p92
      // Predicated region
      $region51: #{custom-call.13} parent=5 // pred_check
        _
      $region52: #{custom-call.13} parent=5 // pred_check_branch
        %95 = sbr.rel (%p92) target = $region54
      $region53: #{custom-call.13} parent=5 // pred_region
        #allocation2 [shape = 'f32[8,8]{1,0}', space=vmem, size = 0x1000, scoped, tag = 'rescaled input a']
        %s96 = ssub.s32 %s3, 1
        %s97 = sand.u32 %s8, 1
        %s98 = sand.u32 %s8, 1
        %s99 = smul.addr %s98, 8
        %s100 = scalar_lea.vmem [#allocation0], %s99
        %s101 = sand.u32 %s8, 1
        %s102 = sand.u32 %s8, 1
        %s103 = smul.addr %s102, 8
        %s104 = scalar_lea.vmem [#allocation0], %s103
        %s105 = sand.u32 %s8, 1
        %s106 = sand.u32 %s8, 1
        %s107 = smul.addr %s106, 8
        %s108 = scalar_lea.vmem [#allocation1], %s107
        %v109 = vlaneseq
        %v110 = vand.u32 %v109, 127
        %vm111 = vcmp.lt.s32.totalorder %v110, 8
        %v112 = vlaneseq
        %v113 = vshrl.u32 %v112, 7
        %vm115 = vcmp.eq.s32.totalorder %v113, %v110
        %v116 = vld [vmem:[%s100] sm:$0xff]
        %v117 = vsel %vm115, %v116, 0.0
        %118 = vadd.xlane.f32.xlu0 %v117
        %v119 = vpop.xlane.xlu0 %118
        %vm120 = vcmp.ge.s32.totalorder %v113, %v110
        %vm121 = vmand %vm120, %vm111
        %v122 = vsel %vm121, %v116, 0.0
        %v123 = vrcp.pop %v119
        %v124 = vmul.f32 %v119, %v123
        %v125 = vsub.f32 1.0, %v124
        %v126 = vmul.f32 %v123, %v125
        %v127 = vadd.f32 %v123, %v126
        %vm128 = vweird.f32 %v119
        %vm129 = vweird.f32 %v123
        %vm130 = vmor %vm128, %vm129
        %v131 = vsel %vm130, %v123, %v127
        %v132 = vand.u32 2147483647, %v119
        %vm133 = vcmp.eq.f32.partialorder %v132, 8.507059e+37
        %v134 = vand.u32 %v119, 2147483648
        %v135 = vor.u32 1.1754944e-38, %v134
        %v136 = vsel %vm133, %v135, %v131
        %v137 = vmul.f32 %v122, %v136
        %138 = vst [vmem:[#allocation2] sm:$0xff] %v137
        %v139 = vlaneseq
        %v140 = vand.u32 %v139, 127
        %v141 = vlaneseq
        %v142 = vshrl.u32 %v141, 7
        %vm144 = vcmp.eq.s32.totalorder %v140, %v142
        %v145 = vlaneseq
        %v146 = vand.u32 %v145, 127
        %vm147 = vcmp.eq.s32.totalorder %v146, 0
        %v148 = vsel %vm147, 1.0, -1.0
        %v149 = vsel %vm144, %v148, 0.0
        %s150 = scalar_lea.vmem [#allocation2], 1
        %v151 = vld [vmem:[%s150] ss:$0 sm:$0xff]
        %v152 = vxor.u32 %v151, 2147483648
        %v153 = vlaneseq
        %v154 = vand.u32 %v153, 127
        %vm155 = vcmp.eq.s32.totalorder %v154, 1
        %v156 = vmul.f32 %v152, %v149
        %157 = vadd.xlane.f32.xlu0 %v156
        %v158 = vpop.xlane.xlu0 %157
        %v159 = vsel %vm155, %v158, %v149
        %s160 = scalar_lea.vmem [#allocation2], 2
        %v161 = vld [vmem:[%s160] ss:$0 sm:$0xff]
        %v162 = vxor.u32 %v161, 2147483648
        %v163 = vlaneseq
        %v164 = vand.u32 %v163, 127
        %vm165 = vcmp.eq.s32.totalorder %v164, 2
        %v166 = vmul.f32 %v162, %v159
        %167 = vadd.xlane.f32.xlu0 %v166
        %v168 = vpop.xlane.xlu0 %167
        %v169 = vsel %vm165, %v168, %v159
        %s170 = scalar_lea.vmem [#allocation2], 3
        %v171 = vld [vmem:[%s170] ss:$0 sm:$0xff]
        %v172 = vxor.u32 %v171, 2147483648
        %v173 = vlaneseq
        %v174 = vand.u32 %v173, 127
        %vm175 = vcmp.eq.s32.totalorder %v174, 3
        %v176 = vmul.f32 %v172, %v169
        %177 = vadd.xlane.f32.xlu0 %v176
        %v178 = vpop.xlane.xlu0 %177
        %v179 = vsel %vm175, %v178, %v169
        %s180 = scalar_lea.vmem [#allocation2], 4
        %v181 = vld [vmem:[%s180] ss:$0 sm:$0xff]
        %v182 = vxor.u32 %v181, 2147483648
        %v183 = vlaneseq
        %v184 = vand.u32 %v183, 127
        %vm185 = vcmp.eq.s32.totalorder %v184, 4
        %v186 = vmul.f32 %v182, %v179
        %187 = vadd.xlane.f32.xlu0 %v186
        %v188 = vpop.xlane.xlu0 %187
        %v189 = vsel %vm185, %v188, %v179
        %s190 = scalar_lea.vmem [#allocation2], 5
        %v191 = vld [vmem:[%s190] ss:$0 sm:$0xff]
        %v192 = vxor.u32 %v191, 2147483648
        %v193 = vlaneseq
        %v194 = vand.u32 %v193, 127
        %vm195 = vcmp.eq.s32.totalorder %v194, 5
        %v196 = vmul.f32 %v192, %v189
        %197 = vadd.xlane.f32.xlu0 %v196
        %v198 = vpop.xlane.xlu0 %197
        %v199 = vsel %vm195, %v198, %v189
        %s200 = scalar_lea.vmem [#allocation2], 6
        %v201 = vld [vmem:[%s200] ss:$0 sm:$0xff]
        %v202 = vxor.u32 %v201, 2147483648
        %v203 = vlaneseq
        %v204 = vand.u32 %v203, 127
        %vm205 = vcmp.eq.s32.totalorder %v204, 6
        %v206 = vmul.f32 %v202, %v199
        %207 = vadd.xlane.f32.xlu0 %v206
        %v208 = vpop.xlane.xlu0 %207
        %v209 = vsel %vm205, %v208, %v199
        %s210 = scalar_lea.vmem [#allocation2], 7
        %v211 = vld [vmem:[%s210] ss:$0 sm:$0xff]
        %v212 = vxor.u32 %v211, 2147483648
        %v213 = vlaneseq
        %v214 = vand.u32 %v213, 127
        %vm215 = vcmp.eq.s32.totalorder %v214, 7
        %v216 = vmul.f32 %v212, %v209
        %217 = vadd.xlane.f32.xlu0 %v216
        %v218 = vpop.xlane.xlu0 %217
        %v219 = vsel %vm215, %v218, %v209
        %v220 = vrcp.pop %v119
        %v221 = vmul.f32 %v119, %v220
        %v222 = vsub.f32 1.0, %v221
        %v223 = vmul.f32 %v220, %v222
        %v224 = vadd.f32 %v220, %v223
        %vm225 = vweird.f32 %v119
        %vm226 = vweird.f32 %v220
        %vm227 = vmor %vm225, %vm226
        %v228 = vsel %vm227, %v220, %v224
        %v229 = vand.u32 2147483647, %v119
        %vm230 = vcmp.eq.f32.partialorder %v229, 8.507059e+37
        %v231 = vand.u32 %v119, 2147483648
        %v232 = vor.u32 1.1754944e-38, %v231
        %v233 = vsel %vm230, %v232, %v228
        %v234 = vmul.f32 %v219, %v233
        %vm235 = vweird.f32 %v119
        %v236 = vsel %vm235, %v219, %v234
        %237 = vst [vmem:[%s108] sm:$0xff] %v236
        %s238 = sand.u32 %s8, 1
        %s239 = sand.u32 %s8, 1
        %s240 = smul.addr %s239, 8
        %s241 = scalar_lea.vmem [#allocation1], %s240
        %s242 = sadd.s32 %s17, %s16
        %s243 = sadd.s32 %s242, %s15
        %s244 = sadd.s32 %s243, %s14
        %s245 = smul.addr %s244, 8
        %s246 = scalar_lea.vmem %s1, %s245
        // Predicated region
        $region55: #{custom-call.13} parent=53 // pred_check
          _
        $region56: #{custom-call.13} parent=53 // pred_check_branch
          %248 = sbr.rel (0) target = $region58
        $region57: #{custom-call.13} parent=53 // pred_region
          // Predicated region
          $region59: #{custom-call.13} parent=57 // pred_check
            _
          $region60: #{custom-call.13} parent=57 // pred_check_branch
            %250 = sbr.rel (0) target = $region62
          $region61: #{custom-call.13} parent=57 // pred_region
            // Predicated region
            $region74: #{custom-call.13} parent=61 // pred_check
              _
            $region75: #{custom-call.13} parent=61 // pred_check_branch
              %266 = sbr.rel (0) target = $region77
            $region76: #{custom-call.13} parent=61 // pred_region
              loop: start=0, step=1, limit=1
              $region78: #{custom-call.13} parent=76 // loop_pre_header
                _
              $region79: #{custom-call.13} parent=76 // loop_header
                %s268 = sphi 0, %s272
                %p269 = scmp.ge.s32.totalorder %s268, 1
                %s273 = sphi %s241, %s241
                %s274 = sphi %s246, %s246
              $region80: #{custom-call.13} parent=76 // loop_header_branch
                %271 = sbr.rel (%p269) target = $region84
              $region81: #{custom-call.13} parent=76 // loop_body
                %v275 = vld [vmem:[%s273] sm:$0xff]
                %276 = vst [vmem:[%s274] sm:$0xff] %v275
              $region82: #{custom-call.13} parent=76 // loop_footer
                %s272 = sadd.s32 1, %s268
              $region83: #{custom-call.13} parent=76 // loop_footer_branch
                %267 = sbr.rel target = $region79
              $region84: #{custom-call.13} parent=76 // loop_exit
                _
            $region77: #{custom-call.13} parent=61 // pred_fallthru
              _
            // Predicated region
            $region85: #{custom-call.13} parent=61 // pred_check
              _
            $region86: #{custom-call.13} parent=61 // pred_check_branch
              %278 = sbr.rel target = $region88
            $region87: #{custom-call.13} parent=61 // pred_region
              _
            $region88: #{custom-call.13} parent=61 // pred_fallthru
              _
          $region62: #{custom-call.13} parent=57 // pred_fallthru
            _
          // Predicated region
          $region63: #{custom-call.13} parent=57 // pred_check
            _
          $region64: #{custom-call.13} parent=57 // pred_check_branch
            %252 = sbr.rel target = $region66
          $region65: #{custom-call.13} parent=57 // pred_region
            %s254 = ssub.s32 256, 1
            loop: start=0, step=1, limit=1
            $region67: #{custom-call.13} parent=65 // loop_pre_header
              _
            $region68: #{custom-call.13} parent=65 // loop_header
              %s256 = sphi 0, %s260
              %p257 = scmp.ge.s32.totalorder %s256, 1
              %s261 = sphi %s241, %s241
              %s262 = sphi %s246, %s246
            $region69: #{custom-call.13} parent=65 // loop_header_branch
              %259 = sbr.rel (%p257) target = $region73
            $region70: #{custom-call.13} parent=65 // loop_body
              %v263 = vld [vmem:[%s261] sm:%s254]
              %264 = vst [vmem:[%s262] sm:%s254] %v263
            $region71: #{custom-call.13} parent=65 // loop_footer
              %s260 = sadd.s32 1, %s256
            $region72: #{custom-call.13} parent=65 // loop_footer_branch
              %255 = sbr.rel target = $region68
            $region73: #{custom-call.13} parent=65 // loop_exit
              _
          $region66: #{custom-call.13} parent=57 // pred_fallthru
            _
        $region58: #{custom-call.13} parent=53 // pred_fallthru
          _
        %279 = vnop
      $region54: #{custom-call.13} parent=5 // pred_fallthru
        _
      %p280 = scmp.le.s32.totalorder 2, %s3
      // Predicated region
      $region89: #{custom-call.13} parent=5 // pred_check
        %p281 = pneg %p280
      $region90: #{custom-call.13} parent=5 // pred_check_branch
        %283 = sbr.rel (%p281) target = $region92
      $region91: #{custom-call.13} parent=5 // pred_region
        %s284 = ssub.s32 %s3, 2
        %s285 = sand.u32 %s9, 1
        %s286 = sand.u32 %s9, 1
        %s287 = smul.addr %s286, 8
        %s288 = scalar_lea.vmem [#allocation1], %s287
      $region92: #{custom-call.13} parent=5 // pred_fallthru
        _
    $region6: #{custom-call.13} parent=1 // loop_footer
      %s7 = sadd.s32 1, %s3
    $region7: #{custom-call.13} parent=1 // loop_footer_branch
      %2 = sbr.rel target = $region3
    $region8: #{custom-call.13} parent=1 // loop_exit
      _

// kernel: custom-call.12
$region0: #{custom-call.12}
  %s0 = inlined_call_operand.vmem [shape: f32[2,1,8,8], index: 0, kind: input, shape index: {}]
  %s1 = inlined_call_operand.vmem [shape: f32[2,1,8,8], index: 1, kind: output, shape index: {}]
  $region1: #{custom-call.12} parent=0
    #allocation0 [shape = 'u8[8192]{0}', space=vmem, size = 0x2000, scoped, tag = 'operand span for operand 0']
    #allocation1 [shape = 'u8[8192]{0}', space=vmem, size = 0x2000, scoped, tag = 'operand span for operand 1']
    loop: start=0, step=1, limit=4
    $region2: #{custom-call.12} parent=1 // loop_pre_header
      _
    $region3: #{custom-call.12} parent=1 // loop_header
      %s3 = sphi 0, %s7
      %p4 = scmp.ge.s32.totalorder %s3, 4
      %s10 = sphi 0, %s36
      %s11 = sphi 0, %s32
      %s12 = sphi 0, %s28
      %s13 = sphi 0, %s24
      %s14 = sphi 0, %s10
      %s15 = sphi 0, %s11
      %s16 = sphi 0, %s12
      %s17 = sphi 0, %s13
      %s18 = sphi 0, %s14
      %s19 = sphi 0, %s15
      %s20 = sphi 0, %s16
      %s21 = sphi 0, %s17
    $region4: #{custom-call.12} parent=1 // loop_header_branch
      %6 = sbr.rel (%p4) target = $region8
    $region5: #{custom-call.12} parent=1 // loop_body
      %s8 = ssub.s32 %s3, 1
      %s9 = ssub.s32 %s3, 2
      %s22 = sadd.s32 1, %s13
      %p23 = scmp.ge.s32.totalorder %s22, 1
      %s24 = scalar_select %p23, 0, %s22
      %s25 = sadd.s32 1, %s12
      %s26 = scalar_select %p23, %s25, %s12
      %p27 = scmp.ge.s32.totalorder %s26, 1
      %s28 = scalar_select %p27, 0, %s26
      %s29 = sadd.s32 1, %s11
      %s30 = scalar_select %p27, %s29, %s11
      %p31 = scmp.ge.s32.totalorder %s30, 1
      %s32 = scalar_select %p31, 0, %s30
      %s33 = sadd.s32 1, %s10
      %s34 = scalar_select %p31, %s33, %s10
      %p35 = scmp.ge.s32.totalorder %s34, 2
      %s36 = scalar_select %p35, 0, %s34
      %p37 = scmp.le.s32.totalorder 1, %s3
      %p38 = scmp.lt.s32.totalorder %s3, 3
      %p39 = pnand %p37, %p38
      %p40 = pneg %p39
      // Predicated region
      $region9: #{custom-call.12} parent=5 // pred_check
        _
      $region10: #{custom-call.12} parent=5 // pred_check_branch
        %42 = sbr.rel (%p39) target = $region12
      $region11: #{custom-call.12} parent=5 // pred_region
        %s43 = ssub.s32 %s3, 1
      $region12: #{custom-call.12} parent=5 // pred_fallthru
        _
      %p44 = scmp.lt.s32.totalorder %s3, 2
      // Predicated region
      $region13: #{custom-call.12} parent=5 // pred_check
        %p45 = pneg %p44
      $region14: #{custom-call.12} parent=5 // pred_check_branch
        %47 = sbr.rel (%p45) target = $region16
      $region15: #{custom-call.12} parent=5 // pred_region
        %s48 = sand.u32 %s3, 1
        %s49 = sand.u32 %s3, 1
        %s50 = smul.addr %s49, 8
        %s51 = scalar_lea.vmem [#allocation0], %s50
        %s52 = sadd.s32 %s13, %s12
        %s53 = sadd.s32 %s52, %s11
        %s54 = sadd.s32 %s53, %s10
        %s55 = smul.addr %s54, 8
        %s56 = scalar_lea.vmem %s0, %s55
        // Predicated region
        $region17: #{custom-call.12} parent=15 // pred_check
          _
        $region18: #{custom-call.12} parent=15 // pred_check_branch
          %58 = sbr.rel (0) target = $region20
        $region19: #{custom-call.12} parent=15 // pred_region
          // Predicated region
          $region21: #{custom-call.12} parent=19 // pred_check
            _
          $region22: #{custom-call.12} parent=19 // pred_check_branch
            %60 = sbr.rel (0) target = $region24
          $region23: #{custom-call.12} parent=19 // pred_region
            // Predicated region
            $region36: #{custom-call.12} parent=23 // pred_check
              _
            $region37: #{custom-call.12} parent=23 // pred_check_branch
              %76 = sbr.rel (0) target = $region39
            $region38: #{custom-call.12} parent=23 // pred_region
              loop: start=0, step=1, limit=1
              $region40: #{custom-call.12} parent=38 // loop_pre_header
                _
              $region41: #{custom-call.12} parent=38 // loop_header
                %s78 = sphi 0, %s82
                %p79 = scmp.ge.s32.totalorder %s78, 1
                %s83 = sphi %s56, %s56
                %s84 = sphi %s51, %s51
              $region42: #{custom-call.12} parent=38 // loop_header_branch
                %81 = sbr.rel (%p79) target = $region46
              $region43: #{custom-call.12} parent=38 // loop_body
                %v85 = vld [vmem:[%s83] sm:$0xff]
                %86 = vst [vmem:[%s84] sm:$0xff] %v85
              $region44: #{custom-call.12} parent=38 // loop_footer
                %s82 = sadd.s32 1, %s78
              $region45: #{custom-call.12} parent=38 // loop_footer_branch
                %77 = sbr.rel target = $region41
              $region46: #{custom-call.12} parent=38 // loop_exit
                _
            $region39: #{custom-call.12} parent=23 // pred_fallthru
              _
            // Predicated region
            $region47: #{custom-call.12} parent=23 // pred_check
              _
            $region48: #{custom-call.12} parent=23 // pred_check_branch
              %88 = sbr.rel target = $region50
            $region49: #{custom-call.12} parent=23 // pred_region
              _
            $region50: #{custom-call.12} parent=23 // pred_fallthru
              _
          $region24: #{custom-call.12} parent=19 // pred_fallthru
            _
          // Predicated region
          $region25: #{custom-call.12} parent=19 // pred_check
            _
          $region26: #{custom-call.12} parent=19 // pred_check_branch
            %62 = sbr.rel target = $region28
          $region27: #{custom-call.12} parent=19 // pred_region
            %s64 = ssub.s32 256, 1
            loop: start=0, step=1, limit=1
            $region29: #{custom-call.12} parent=27 // loop_pre_header
              _
            $region30: #{custom-call.12} parent=27 // loop_header
              %s66 = sphi 0, %s70
              %p67 = scmp.ge.s32.totalorder %s66, 1
              %s71 = sphi %s56, %s56
              %s72 = sphi %s51, %s51
            $region31: #{custom-call.12} parent=27 // loop_header_branch
              %69 = sbr.rel (%p67) target = $region35
            $region32: #{custom-call.12} parent=27 // loop_body
              %v73 = vld [vmem:[%s71] sm:%s64]
              %74 = vst [vmem:[%s72] sm:%s64] %v73
            $region33: #{custom-call.12} parent=27 // loop_footer
              %s70 = sadd.s32 1, %s66
            $region34: #{custom-call.12} parent=27 // loop_footer_branch
              %65 = sbr.rel target = $region30
            $region35: #{custom-call.12} parent=27 // loop_exit
              _
          $region28: #{custom-call.12} parent=19 // pred_fallthru
            _
        $region20: #{custom-call.12} parent=15 // pred_fallthru
          _
        %89 = vnop
      $region16: #{custom-call.12} parent=5 // pred_fallthru
        _
      %p90 = scmp.le.s32.totalorder 1, %s3
      %p91 = scmp.lt.s32.totalorder %s3, 3
      %p92 = pnand %p90, %p91
      %p93 = pneg %p92
      // Predicated region
      $region51: #{custom-call.12} parent=5 // pred_check
        _
      $region52: #{custom-call.12} parent=5 // pred_check_branch
        %95 = sbr.rel (%p92) target = $region54
      $region53: #{custom-call.12} parent=5 // pred_region
        #allocation2 [shape = 'f32[8,8]{1,0}', space=vmem, size = 0x1000, scoped, tag = 'rescaled input a']
        %s96 = ssub.s32 %s3, 1
        %s97 = sand.u32 %s8, 1
        %s98 = sand.u32 %s8, 1
        %s99 = smul.addr %s98, 8
        %s100 = scalar_lea.vmem [#allocation0], %s99
        %s101 = sand.u32 %s8, 1
        %s102 = sand.u32 %s8, 1
        %s103 = smul.addr %s102, 8
        %s104 = scalar_lea.vmem [#allocation0], %s103
        %s105 = sand.u32 %s8, 1
        %s106 = sand.u32 %s8, 1
        %s107 = smul.addr %s106, 8
        %s108 = scalar_lea.vmem [#allocation1], %s107
        %v109 = vlaneseq
        %v110 = vand.u32 %v109, 127
        %vm111 = vcmp.lt.s32.totalorder %v110, 8
        %v112 = vlaneseq
        %v113 = vshrl.u32 %v112, 7
        %vm115 = vcmp.eq.s32.totalorder %v113, %v110
        %v116 = vld [vmem:[%s100] sm:$0xff]
        %v117 = vsel %vm115, %v116, 0.0
        %118 = vadd.xlane.f32.xlu0 %v117
        %v119 = vpop.xlane.xlu0 %118
        %vm120 = vcmp.le.s32.totalorder %v113, %v110
        %vm121 = vmand %vm120, %vm111
        %v122 = vsel %vm121, %v116, 0.0
        %v123 = vrcp.pop %v119
        %v124 = vmul.f32 %v119, %v123
        %v125 = vsub.f32 1.0, %v124
        %v126 = vmul.f32 %v123, %v125
        %v127 = vadd.f32 %v123, %v126
        %vm128 = vweird.f32 %v119
        %vm129 = vweird.f32 %v123
        %vm130 = vmor %vm128, %vm129
        %v131 = vsel %vm130, %v123, %v127
        %v132 = vand.u32 2147483647, %v119
        %vm133 = vcmp.eq.f32.partialorder %v132, 8.507059e+37
        %v134 = vand.u32 %v119, 2147483648
        %v135 = vor.u32 1.1754944e-38, %v134
        %v136 = vsel %vm133, %v135, %v131
        %v137 = vmul.f32 %v122, %v136
        %138 = vst [vmem:[#allocation2] sm:$0xff] %v137
        %v139 = vlaneseq
        %v140 = vand.u32 %v139, 127
        %v141 = vlaneseq
        %v142 = vshrl.u32 %v141, 7
        %vm144 = vcmp.eq.s32.totalorder %v140, %v142
        %v145 = vlaneseq
        %v146 = vand.u32 %v145, 127
        %vm147 = vcmp.eq.s32.totalorder %v146, 7
        %v148 = vsel %vm147, 1.0, -1.0
        %v149 = vsel %vm144, %v148, 0.0
        %s150 = scalar_lea.vmem [#allocation2], 6
        %v151 = vld [vmem:[%s150] ss:$0 sm:$0xff]
        %v152 = vxor.u32 %v151, 2147483648
        %v153 = vlaneseq
        %v154 = vand.u32 %v153, 127
        %vm155 = vcmp.eq.s32.totalorder %v154, 6
        %v156 = vmul.f32 %v152, %v149
        %157 = vadd.xlane.f32.xlu0 %v156
        %v158 = vpop.xlane.xlu0 %157
        %v159 = vsel %vm155, %v158, %v149
        %s160 = scalar_lea.vmem [#allocation2], 5
        %v161 = vld [vmem:[%s160] ss:$0 sm:$0xff]
        %v162 = vxor.u32 %v161, 2147483648
        %v163 = vlaneseq
        %v164 = vand.u32 %v163, 127
        %vm165 = vcmp.eq.s32.totalorder %v164, 5
        %v166 = vmul.f32 %v162, %v159
        %167 = vadd.xlane.f32.xlu0 %v166
        %v168 = vpop.xlane.xlu0 %167
        %v169 = vsel %vm165, %v168, %v159
        %s170 = scalar_lea.vmem [#allocation2], 4
        %v171 = vld [vmem:[%s170] ss:$0 sm:$0xff]
        %v172 = vxor.u32 %v171, 2147483648
        %v173 = vlaneseq
        %v174 = vand.u32 %v173, 127
        %vm175 = vcmp.eq.s32.totalorder %v174, 4
        %v176 = vmul.f32 %v172, %v169
        %177 = vadd.xlane.f32.xlu0 %v176
        %v178 = vpop.xlane.xlu0 %177
        %v179 = vsel %vm175, %v178, %v169
        %s180 = scalar_lea.vmem [#allocation2], 3
        %v181 = vld [vmem:[%s180] ss:$0 sm:$0xff]
        %v182 = vxor.u32 %v181, 2147483648
        %v183 = vlaneseq
        %v184 = vand.u32 %v183, 127
        %vm185 = vcmp.eq.s32.totalorder %v184, 3
        %v186 = vmul.f32 %v182, %v179
        %187 = vadd.xlane.f32.xlu0 %v186
        %v188 = vpop.xlane.xlu0 %187
        %v189 = vsel %vm185, %v188, %v179
        %s190 = scalar_lea.vmem [#allocation2], 2
        %v191 = vld [vmem:[%s190] ss:$0 sm:$0xff]
        %v192 = vxor.u32 %v191, 2147483648
        %v193 = vlaneseq
        %v194 = vand.u32 %v193, 127
        %vm195 = vcmp.eq.s32.totalorder %v194, 2
        %v196 = vmul.f32 %v192, %v189
        %197 = vadd.xlane.f32.xlu0 %v196
        %v198 = vpop.xlane.xlu0 %197
        %v199 = vsel %vm195, %v198, %v189
        %s200 = scalar_lea.vmem [#allocation2], 1
        %v201 = vld [vmem:[%s200] ss:$0 sm:$0xff]
        %v202 = vxor.u32 %v201, 2147483648
        %v203 = vlaneseq
        %v204 = vand.u32 %v203, 127
        %vm205 = vcmp.eq.s32.totalorder %v204, 1
        %v206 = vmul.f32 %v202, %v199
        %207 = vadd.xlane.f32.xlu0 %v206
        %v208 = vpop.xlane.xlu0 %207
        %v209 = vsel %vm205, %v208, %v199
        %v210 = vld [vmem:[#allocation2] ss:$0 sm:$0xff]
        %v211 = vxor.u32 %v210, 2147483648
        %v212 = vlaneseq
        %v213 = vand.u32 %v212, 127
        %vm214 = vcmp.eq.s32.totalorder %v213, 0
        %v215 = vmul.f32 %v211, %v209
        %216 = vadd.xlane.f32.xlu0 %v215
        %v217 = vpop.xlane.xlu0 %216
        %v218 = vsel %vm214, %v217, %v209
        %v219 = vrcp.pop %v119
        %v220 = vmul.f32 %v119, %v219
        %v221 = vsub.f32 1.0, %v220
        %v222 = vmul.f32 %v219, %v221
        %v223 = vadd.f32 %v219, %v222
        %vm224 = vweird.f32 %v119
        %vm225 = vweird.f32 %v219
        %vm226 = vmor %vm224, %vm225
        %v227 = vsel %vm226, %v219, %v223
        %v228 = vand.u32 2147483647, %v119
        %vm229 = vcmp.eq.f32.partialorder %v228, 8.507059e+37
        %v230 = vand.u32 %v119, 2147483648
        %v231 = vor.u32 1.1754944e-38, %v230
        %v232 = vsel %vm229, %v231, %v227
        %v233 = vmul.f32 %v218, %v232
        %vm234 = vweird.f32 %v119
        %v235 = vsel %vm234, %v218, %v233
        %236 = vst [vmem:[%s108] sm:$0xff] %v235
        %s237 = sand.u32 %s8, 1
        %s238 = sand.u32 %s8, 1
        %s239 = smul.addr %s238, 8
        %s240 = scalar_lea.vmem [#allocation1], %s239
        %s241 = sadd.s32 %s17, %s16
        %s242 = sadd.s32 %s241, %s15
        %s243 = sadd.s32 %s242, %s14
        %s244 = smul.addr %s243, 8
        %s245 = scalar_lea.vmem %s1, %s244
        // Predicated region
        $region55: #{custom-call.12} parent=53 // pred_check
          _
        $region56: #{custom-call.12} parent=53 // pred_check_branch
          %247 = sbr.rel (0) target = $region58
        $region57: #{custom-call.12} parent=53 // pred_region
          // Predicated region
          $region59: #{custom-call.12} parent=57 // pred_check
            _
          $region60: #{custom-call.12} parent=57 // pred_check_branch
            %249 = sbr.rel (0) target = $region62
          $region61: #{custom-call.12} parent=57 // pred_region
            // Predicated region
            $region74: #{custom-call.12} parent=61 // pred_check
              _
            $region75: #{custom-call.12} parent=61 // pred_check_branch
              %265 = sbr.rel (0) target = $region77
            $region76: #{custom-call.12} parent=61 // pred_region
              loop: start=0, step=1, limit=1
              $region78: #{custom-call.12} parent=76 // loop_pre_header
                _
              $region79: #{custom-call.12} parent=76 // loop_header
                %s267 = sphi 0, %s271
                %p268 = scmp.ge.s32.totalorder %s267, 1
                %s272 = sphi %s240, %s240
                %s273 = sphi %s245, %s245
              $region80: #{custom-call.12} parent=76 // loop_header_branch
                %270 = sbr.rel (%p268) target = $region84
              $region81: #{custom-call.12} parent=76 // loop_body
                %v274 = vld [vmem:[%s272] sm:$0xff]
                %275 = vst [vmem:[%s273] sm:$0xff] %v274
              $region82: #{custom-call.12} parent=76 // loop_footer
                %s271 = sadd.s32 1, %s267
              $region83: #{custom-call.12} parent=76 // loop_footer_branch
                %266 = sbr.rel target = $region79
              $region84: #{custom-call.12} parent=76 // loop_exit
                _
            $region77: #{custom-call.12} parent=61 // pred_fallthru
              _
            // Predicated region
            $region85: #{custom-call.12} parent=61 // pred_check
              _
            $region86: #{custom-call.12} parent=61 // pred_check_branch
              %277 = sbr.rel target = $region88
            $region87: #{custom-call.12} parent=61 // pred_region
              _
            $region88: #{custom-call.12} parent=61 // pred_fallthru
              _
          $region62: #{custom-call.12} parent=57 // pred_fallthru
            _
          // Predicated region
          $region63: #{custom-call.12} parent=57 // pred_check
            _
          $region64: #{custom-call.12} parent=57 // pred_check_branch
            %251 = sbr.rel target = $region66
          $region65: #{custom-call.12} parent=57 // pred_region
            %s253 = ssub.s32 256, 1
            loop: start=0, step=1, limit=1
            $region67: #{custom-call.12} parent=65 // loop_pre_header
              _
            $region68: #{custom-call.12} parent=65 // loop_header
              %s255 = sphi 0, %s259
              %p256 = scmp.ge.s32.totalorder %s255, 1
              %s260 = sphi %s240, %s240
              %s261 = sphi %s245, %s245
            $region69: #{custom-call.12} parent=65 // loop_header_branch
              %258 = sbr.rel (%p256) target = $region73
            $region70: #{custom-call.12} parent=65 // loop_body
              %v262 = vld [vmem:[%s260] sm:%s253]
              %263 = vst [vmem:[%s261] sm:%s253] %v262
            $region71: #{custom-call.12} parent=65 // loop_footer
              %s259 = sadd.s32 1, %s255
            $region72: #{custom-call.12} parent=65 // loop_footer_branch
              %254 = sbr.rel target = $region68
            $region73: #{custom-call.12} parent=65 // loop_exit
              _
          $region66: #{custom-call.12} parent=57 // pred_fallthru
            _
        $region58: #{custom-call.12} parent=53 // pred_fallthru
          _
        %278 = vnop
      $region54: #{custom-call.12} parent=5 // pred_fallthru
        _
      %p279 = scmp.le.s32.totalorder 2, %s3
      // Predicated region
      $region89: #{custom-call.12} parent=5 // pred_check
        %p280 = pneg %p279
      $region90: #{custom-call.12} parent=5 // pred_check_branch
        %282 = sbr.rel (%p280) target = $region92
      $region91: #{custom-call.12} parent=5 // pred_region
        %s283 = ssub.s32 %s3, 2
        %s284 = sand.u32 %s9, 1
        %s285 = sand.u32 %s9, 1
        %s286 = smul.addr %s285, 8
        %s287 = scalar_lea.vmem [#allocation1], %s286
      $region92: #{custom-call.12} parent=5 // pred_fallthru
        _
    $region6: #{custom-call.12} parent=1 // loop_footer
      %s7 = sadd.s32 1, %s3
    $region7: #{custom-call.12} parent=1 // loop_footer_branch
      %2 = sbr.rel target = $region3
    $region8: #{custom-call.12} parent=1 // loop_exit
      _

// kernel: struct_attention_forward.2
$region0: #{struct_attention_forward.2}
  #allocation0 [shape = 'u32[]', space=smem, size = 0x4, offset = 0x4, fixed_abs, tag = 'smem constant byte address 0x4 - core index']
  #allocation1 [shape = 'u32[72,128]{1,0:T(1,128)}', space=vmem, size = 0x9000, scoped, tag = 'internal scratch']
  %s0 = inlined_call_operand.vmem [shape: f32[2,8,32], index: 0, kind: input, shape index: {}]
  %s1 = inlined_call_operand.vmem [shape: f32[32,64], index: 1, kind: input, shape index: {}]
  %s2 = inlined_call_operand.vmem [shape: f32[1,64], index: 2, kind: input, shape index: {}]
  %s3 = inlined_call_operand.vmem [shape: f32[64,64], index: 3, kind: input, shape index: {}]
  %s4 = inlined_call_operand.vmem [shape: f32[2,1,1], index: 4, kind: input, shape index: {}]
  %s5 = inlined_call_operand.vmem [shape: f32[2,8,8], index: 5, kind: output, shape index: {0}]
  %s6 = inlined_call_operand.vmem [shape: f32[2,8,8], index: 6, kind: output, shape index: {1}]
  %7 = xla_tuple %s5, %s6
  %s8 = sld [smem:[#allocation0]]
  $region38: #{struct_attention_forward.2} parent=0
    _
  %s10 = ssub.s32 1, %s8
  %s11 = scalar_select 0, %s10, %s8
  // Predicated region
  $region2: #{struct_attention_forward.2} parent=0 // pred_check
    _
  $region3: #{struct_attention_forward.2} parent=0 // pred_check_branch
    %13 = sbr.rel (0) target = $region5
  $region4: #{struct_attention_forward.2} parent=0 // pred_region
    _
  $region5: #{struct_attention_forward.2} parent=0 // pred_fallthru
    _
  // Predicated region
  $region6: #{struct_attention_forward.2} parent=0 // pred_check
    _
  $region7: #{struct_attention_forward.2} parent=0 // pred_check_branch
    %15 = sbr.rel (0) target = $region9
  $region8: #{struct_attention_forward.2} parent=0 // pred_region
    _
  $region9: #{struct_attention_forward.2} parent=0 // pred_fallthru
    _
  // Predicated region
  $region10: #{struct_attention_forward.2} parent=0 // pred_check
    _
  $region11: #{struct_attention_forward.2} parent=0 // pred_check_branch
    %17 = sbr.rel (0) target = $region13
  $region12: #{struct_attention_forward.2} parent=0 // pred_region
    _
  $region13: #{struct_attention_forward.2} parent=0 // pred_fallthru
    _
  // Predicated region
  $region14: #{struct_attention_forward.2} parent=0 // pred_check
    _
  $region15: #{struct_attention_forward.2} parent=0 // pred_check_branch
    %19 = sbr.rel (0) target = $region17
  $region16: #{struct_attention_forward.2} parent=0 // pred_region
    _
  $region17: #{struct_attention_forward.2} parent=0 // pred_fallthru
    _
  // Predicated region
  $region18: #{struct_attention_forward.2} parent=0 // pred_check
    _
  $region19: #{struct_attention_forward.2} parent=0 // pred_check_branch
    %21 = sbr.rel (0) target = $region21
  $region20: #{struct_attention_forward.2} parent=0 // pred_region
    _
  $region21: #{struct_attention_forward.2} parent=0 // pred_fallthru
    _
  %v22 = vld [vmem:[%s0] sm:$0xff]
  %v23 = vld [vmem:[%s0 + $0x8] sm:$0xff]
  %v24 = vld [vmem:[%s1] sm:$0xff]
  %v25 = vld [vmem:[%s1 + $0x8] sm:$0xff]
  %v26 = vld [vmem:[%s1 + $0x10] sm:$0xff]
  %v27 = vld [vmem:[%s1 + $0x18] sm:$0xff]
  %v28 = vld [vmem:[%s2] sm:$0x1]
  %v30 = vperm.slane %v28, 0
  %vm32 = vcmask 261120
  %v34 = vsel %vm32, %v22, 0
  %v37 = vsel %vm32, %v23, 0
  %39 = vmatpush.msra.mxu0 0.0
  %40 = vmatpush.msra.mxu0 0.0
  %41 = vmatpush.msra.mxu0 0.0
  %42 = vmatpush.msra.mxu0 0.0
  %43 = vmatpush.msra.mxu0 0.0
  %44 = vmatpush.msra.mxu0 0.0
  %45 = vmatpush.msra.mxu0 0.0
  %46 = vmatpush.msra.mxu0 0.0
  %47 = vmatpush.msra.mxu0 0.0
  %48 = vmatpush.msra.mxu0 0.0
  %49 = vmatpush.msra.mxu0 0.0
  %50 = vmatpush.msra.mxu0 0.0
  %51 = vmatpush.msra.mxu0 %v27
  %52 = vmatpush.msra.mxu0 %v26
  %53 = vmatpush.msra.mxu0 %v25
  %54 = vmatpush.msra.mxu0 %v24
  %55 = vmatmul.f32.gmra.mxu0 %v34
  %v56 = vpop.f32.mrf.mxu0
  %v57 = vadd.f32 %v30, %v56
  %58 = vmatmul.f32.gmra.mxu0 %v37
  %v59 = vpop.f32.mrf.mxu0
  %v60 = vadd.f32 %v30, %v59
  %61 = vdwg.mxu0
  %v62 = vtanh.pop %v57
  %v63 = vtanh.pop %v60
  %v64 = vld [vmem:[%s3] sm:$0xff]
  %v65 = vld [vmem:[%s3 + $0x8] sm:$0xff]
  %v66 = vld [vmem:[%s3 + $0x10] sm:$0xff]
  %v67 = vld [vmem:[%s3 + $0x18] sm:$0xff]
  %v68 = vld [vmem:[%s3 + $0x20] sm:$0xff]
  %v69 = vld [vmem:[%s3 + $0x28] sm:$0xff]
  %v70 = vld [vmem:[%s3 + $0x30] sm:$0xff]
  %v71 = vld [vmem:[%s3 + $0x38] sm:$0xff]
  %vm72 = vcmask 523264
  %v74 = vsel %vm72, %v62, 0
  %v77 = vsel %vm72, %v63, 0
  %79 = vmatpush.msra.mxu0 0.0
  %80 = vmatpush.msra.mxu0 0.0
  %81 = vmatpush.msra.mxu0 0.0
  %82 = vmatpush.msra.mxu0 0.0
  %83 = vmatpush.msra.mxu0 0.0
  %84 = vmatpush.msra.mxu0 0.0
  %85 = vmatpush.msra.mxu0 0.0
  %86 = vmatpush.msra.mxu0 0.0
  %87 = vmatpush.msra.mxu0 %v71
  %88 = vmatpush.msra.mxu0 %v70
  %89 = vmatpush.msra.mxu0 %v69
  %90 = vmatpush.msra.mxu0 %v68
  %91 = vmatpush.msra.mxu0 %v67
  %92 = vmatpush.msra.mxu0 %v66
  %93 = vmatpush.msra.mxu0 %v65
  %94 = vmatpush.msra.mxu0 %v64
  %95 = vmatmul.f32.gmra.mxu0 %v74
  %v96 = vpop.f32.mrf.mxu0
  %v97 = vadd.f32 0.0, %v96
  %98 = vmatmul.f32.gmra.mxu0 %v77
  %v99 = vpop.f32.mrf.mxu0
  %v100 = vadd.f32 0.0, %v99
  %101 = vdwg.mxu0
  %v103 = vsel %vm72, %v97, 0
  %105 = vmatpush.xpose.msra.mxu0 0.0
  %106 = vmatpush.xpose.msra.mxu0 0.0
  %107 = vmatpush.xpose.msra.mxu0 0.0
  %108 = vmatpush.xpose.msra.mxu0 0.0
  %109 = vmatpush.xpose.msra.mxu0 0.0
  %110 = vmatpush.xpose.msra.mxu0 0.0
  %111 = vmatpush.xpose.msra.mxu0 0.0
  %112 = vmatpush.xpose.msra.mxu0 0.0
  %113 = vmatpush.xpose.msra.mxu0 0.0
  %114 = vmatpush.xpose.msra.mxu0 0.0
  %115 = vmatpush.xpose.msra.mxu0 0.0
  %116 = vmatpush.xpose.msra.mxu0 0.0
  %117 = vmatpush.xpose.msra.mxu0 0.0
  %118 = vmatpush.xpose.msra.mxu0 0.0
  %119 = vmatpush.xpose.msra.mxu0 0.0
  %120 = vmatpush.xpose.msra.mxu0 %v74
  %121 = vmatmul.f32.gmra.mxu0 %v103
  %v122 = vpop.f32.mrf.mxu0
  %v123 = vadd.f32 0.0, %v122
  %124 = vdwg.mxu0
  %v126 = vsel %vm72, %v100, 0
  %128 = vmatpush.xpose.msra.mxu0 0.0
  %129 = vmatpush.xpose.msra.mxu0 0.0
  %130 = vmatpush.xpose.msra.mxu0 0.0
  %131 = vmatpush.xpose.msra.mxu0 0.0
  %132 = vmatpush.xpose.msra.mxu0 0.0
  %133 = vmatpush.xpose.msra.mxu0 0.0
  %134 = vmatpush.xpose.msra.mxu0 0.0
  %135 = vmatpush.xpose.msra.mxu0 0.0
  %136 = vmatpush.xpose.msra.mxu0 0.0
  %137 = vmatpush.xpose.msra.mxu0 0.0
  %138 = vmatpush.xpose.msra.mxu0 0.0
  %139 = vmatpush.xpose.msra.mxu0 0.0
  %140 = vmatpush.xpose.msra.mxu0 0.0
  %141 = vmatpush.xpose.msra.mxu0 0.0
  %142 = vmatpush.xpose.msra.mxu0 0.0
  %143 = vmatpush.xpose.msra.mxu0 %v77
  %144 = vmatmul.f32.gmra.mxu0 %v126
  %v145 = vpop.f32.mrf.mxu0
  %v146 = vadd.f32 0.0, %v145
  %147 = vdwg.mxu0
  %v148 = vlaneseq
  %v149 = vshrl.u32 %v148, 7
  %v150 = vlaneseq
  %v151 = vand.u32 %v150, 127
  %vm152 = vcmp.ne.s32.totalorder %v149, %v151
  %v153 = vmul.f32 %v123, 1.442695
  %v154 = vpow.pop %v153
  %v155 = vmul.f32 %v146, 1.442695
  %v156 = vpow.pop %v155
  %v157 = vsel %vm152, %v154, 0.0
  %v158 = vsel %vm152, %v156, 0.0
  %vm159 = vcmask 64512
  %v160 = vsel %vm159, %v157, 0.0
  %v161 = vrot.slane %v160, 4
  %v162 = vadd.f32 %v160, %v161
  %v163 = vrot.slane %v162, 2
  %v164 = vadd.f32 %v162, %v163
  %v165 = vrot.slane %v164, 1
  %v166 = vadd.f32 %v164, %v165
  %v167 = vsel %vm159, %v158, 0.0
  %v168 = vrot.slane %v167, 4
  %v169 = vadd.f32 %v167, %v168
  %v170 = vrot.slane %v169, 2
  %v171 = vadd.f32 %v169, %v170
  %v172 = vrot.slane %v171, 1
  %v173 = vadd.f32 %v171, %v172
  %v174 = vsub.f32 0.0, %v157
  %v175 = vsub.f32 0.0, %v158
  %v176 = vsel %vm152, %v174, %v166
  %v177 = vsel %vm152, %v175, %v173
  %vm178 = vcmp.eq.s32.totalorder %v149, 0
  %v179 = vld [vmem:[%s4] sm:$0x1]
  %v180 = vld [vmem:[%s4 + $0x1] sm:$0x1]
  %v183 = vperm.slane %v179, 0
  %v184 = vperm.slane %v180, 0
  %185 = vset.pattern.permute.xlu0 0
  %186 = vperm.xlu0 %185, %v183
  %v187 = vpop.permute.xlu0 %186
  %189 = vset.pattern.permute.xlu0 0
  %190 = vperm.xlu0 %189, %v184
  %v191 = vpop.permute.xlu0 %190
  %v193 = vsel %vm178, %v187, %v176
  %v194 = vsel %vm178, %v191, %v177
  %195 = vst.msk [vmem:[%s5] sm:$0xff] %vm159, %v157
  %196 = vst.msk [vmem:[%s5 + $0x8] sm:$0xff] %vm159, %v158
  %197 = vst.msk [vmem:[%s6] sm:$0xff] %vm159, %v193
  %198 = vst.msk [vmem:[%s6 + $0x8] sm:$0xff] %vm159, %v194
  // Predicated region
  $region22: #{struct_attention_forward.2} parent=0 // pred_check
    _
  $region23: #{struct_attention_forward.2} parent=0 // pred_check_branch
    %200 = sbr.rel (0) target = $region25
  $region24: #{struct_attention_forward.2} parent=0 // pred_region
    _
  $region25: #{struct_attention_forward.2} parent=0 // pred_fallthru
    _
  // Predicated region
  $region26: #{struct_attention_forward.2} parent=0 // pred_check
    _
  $region27: #{struct_attention_forward.2} parent=0 // pred_check_branch
    %202 = sbr.rel (0) target = $region29
  $region28: #{struct_attention_forward.2} parent=0 // pred_region
    _
  $region29: #{struct_attention_forward.2} parent=0 // pred_fallthru
    _
  // Predicated region
  $region30: #{struct_attention_forward.2} parent=0 // pred_check
    _
  $region31: #{struct_attention_forward.2} parent=0 // pred_check_branch
    %204 = sbr.rel (0) target = $region33
  $region32: #{struct_attention_forward.2} parent=0 // pred_region
    _
  $region33: #{struct_attention_forward.2} parent=0 // pred_fallthru
    _
  // Predicated region
  $region34: #{struct_attention_forward.2} parent=0 // pred_check
    _
  $region35: #{struct_attention_forward.2} parent=0 // pred_check_branch
    %206 = sbr.rel (0) target = $region37
  $region36: #{struct_attention_forward.2} parent=0 // pred_region
    _
  $region37: #{struct_attention_forward.2} parent=0 // pred_fallthru
    _

// kernel: struct_attention_forward.3
$region0: #{struct_attention_forward.3}
  #allocation0 [shape = 'u32[]', space=smem, size = 0x4, offset = 0x4, fixed_abs, tag = 'smem constant byte address 0x4 - core index']
  #allocation1 [shape = 'u32[72,128]{1,0:T(1,128)}', space=vmem, size = 0x9000, scoped, tag = 'internal scratch']
  %s0 = inlined_call_operand.vmem [shape: f32[2,8,8], index: 0, kind: input, shape index: {}]
  %s1 = inlined_call_operand.vmem [shape: f32[2,8,16], index: 1, kind: input, shape index: {}]
  %s2 = inlined_call_operand.hbm [shape: f32[2,8,8], index: 2, kind: output, shape index: {}]
  %s3 = sld [smem:[#allocation0]]
  $region18: #{struct_attention_forward.3} parent=0
    _
  %s5 = ssub.s32 1, %s3
  %s6 = scalar_select 0, %s5, %s3
  $region1: #{struct_attention_forward.3} parent=0
    #allocation2 [shape = 'u8[8192]{0}', space=vmem, size = 0x2000, scoped, tag = 'output window, operand 0, single buffered']
    #allocation3 [shape = 's32[1]{0}', space=sflag, size = 0x4, scoped, tag = 'scoped memory for struct_attention_forward.3']
    %7 = vsyncpa [#allocation3], 0
    // Predicated region
    $region2: #{struct_attention_forward.3} parent=1 // pred_check
      _
    $region3: #{struct_attention_forward.3} parent=1 // pred_check_branch
      %9 = sbr.rel (0) target = $region5
    $region4: #{struct_attention_forward.3} parent=1 // pred_region
      _
    $region5: #{struct_attention_forward.3} parent=1 // pred_fallthru
      _
    // Predicated region
    $region6: #{struct_attention_forward.3} parent=1 // pred_check
      _
    $region7: #{struct_attention_forward.3} parent=1 // pred_check_branch
      %11 = sbr.rel (0) target = $region9
    $region8: #{struct_attention_forward.3} parent=1 // pred_region
      _
    $region9: #{struct_attention_forward.3} parent=1 // pred_fallthru
      _
    %v12 = vld [vmem:[%s0] sm:$0xff]
    %v13 = vld [vmem:[%s0 + $0x8] sm:$0xff]
    %v14 = vld [vmem:[%s1] sm:$0xff]
    %v15 = vld [vmem:[%s1 + $0x8] sm:$0xff]
    %vm16 = vcmask 64512
    %v18 = vsel %vm16, %v12, 0
    %20 = vmatpush.msra.mxu0 0.0
    %21 = vmatpush.msra.mxu0 0.0
    %22 = vmatpush.msra.mxu0 0.0
    %23 = vmatpush.msra.mxu0 0.0
    %24 = vmatpush.msra.mxu0 0.0
    %25 = vmatpush.msra.mxu0 0.0
    %26 = vmatpush.msra.mxu0 0.0
    %27 = vmatpush.msra.mxu0 0.0
    %28 = vmatpush.msra.mxu0 0.0
    %29 = vmatpush.msra.mxu0 0.0
    %30 = vmatpush.msra.mxu0 0.0
    %31 = vmatpush.msra.mxu0 0.0
    %32 = vmatpush.msra.mxu0 0.0
    %33 = vmatpush.msra.mxu0 0.0
    %34 = vmatpush.msra.mxu0 0.0
    %35 = vmatpush.msra.mxu0 %v14
    %36 = vmatmul.f32.gmra.mxu0 %v18
    %v37 = vpop.f32.mrf.mxu0
    %v38 = vadd.f32 0.0, %v37
    %39 = vdwg.mxu0
    %v41 = vsel %vm16, %v13, 0
    %43 = vmatpush.msra.mxu0 0.0
    %44 = vmatpush.msra.mxu0 0.0
    %45 = vmatpush.msra.mxu0 0.0
    %46 = vmatpush.msra.mxu0 0.0
    %47 = vmatpush.msra.mxu0 0.0
    %48 = vmatpush.msra.mxu0 0.0
    %49 = vmatpush.msra.mxu0 0.0
    %50 = vmatpush.msra.mxu0 0.0
    %51 = vmatpush.msra.mxu0 0.0
    %52 = vmatpush.msra.mxu0 0.0
    %53 = vmatpush.msra.mxu0 0.0
    %54 = vmatpush.msra.mxu0 0.0
    %55 = vmatpush.msra.mxu0 0.0
    %56 = vmatpush.msra.mxu0 0.0
    %57 = vmatpush.msra.mxu0 0.0
    %58 = vmatpush.msra.mxu0 %v15
    %59 = vmatmul.f32.gmra.mxu0 %v41
    %v60 = vpop.f32.mrf.mxu0
    %v61 = vadd.f32 0.0, %v60
    %62 = vdwg.mxu0
    %v63 = vlaneseq
    %v64 = vshrl.u32 %v63, 7
    %v65 = vlaneseq
    %v66 = vand.u32 %v65, 127
    %vm67 = vcmp.ne.s32.totalorder %v66, 0
    %v68 = vsel %vm67, %v38, 0.0
    %v69 = vsel %vm67, %v61, 0.0
    %vm70 = vcmp.ne.s32.totalorder %v64, 0
    %v71 = vsel %vm70, %v38, 0.0
    %v72 = vsel %vm70, %v61, 0.0
    %75 = vrot.lane.b32.xlu0 %v71, 120
    %v76 = vpop.permute.xlu0 %75
    %77 = vrot.lane.b32.xlu0 %v72, 120
    %v78 = vpop.permute.xlu0 %77
    %v81 = vsub.f32 %v68, %v76
    %v82 = vsub.f32 %v69, %v78
    %83 = vst.msk [vmem:[#allocation2] sm:$0xff] %vm16, %v81
    %84 = vst.msk [vmem:[#allocation2 + $0x8] sm:$0xff] %vm16, %v82
    // Predicated region
    $region10: #{struct_attention_forward.3} parent=1 // pred_check
      _
    $region11: #{struct_attention_forward.3} parent=1 // pred_check_branch
      %86 = sbr.rel (0) target = $region13
    $region12: #{struct_attention_forward.3} parent=1 // pred_region
      %88 = vsyncadd [#allocation3], 0
      %s89 = sshll.u32 [#allocation2], 4
      %s90 = int_to_ptr.vmem [resolvable:$true] %s89
      %s91 = sshll.u32 %s2, 4
      %s92 = int_to_ptr.hbm [resolvable:$true] %s91
      %97 = dma.vmem_to_hbm [thread:$0]  %s90, 256, %s92, [#allocation3], 128, 128, 8
    $region13: #{struct_attention_forward.3} parent=1 // pred_fallthru
      _
    // Predicated region
    $region14: #{struct_attention_forward.3} parent=1 // pred_check
      _
    $region15: #{struct_attention_forward.3} parent=1 // pred_check_branch
      %99 = sbr.rel (0) target = $region17
    $region16: #{struct_attention_forward.3} parent=1 // pred_region
      %101 = dma.done [#allocation3], 256
    $region17: #{struct_attention_forward.3} parent=1 // pred_fallthru
      _
    %102 = vsyncpa [#allocation3], 1

</llo_original>
